<compile_context>
chip_gen: v7x
topology: tpu7x:2x2x1
jax: 0.10.0
libtpu: 0.0.40
codegen_flags: <defaults>
</compile_context>

<pallas_src>
import jax
import jax.numpy as jnp
from jax.experimental import pallas as pl
from jax.experimental.pallas import tpu as pltpu


_VMEM_LIMIT = 32 * 1024 * 1024      # raises v5e's 16 MiB default, fits v6e/v7x
_BUDGET_A = 12 * 1024 * 1024        # target working set of the conv+pool kernel
_BUDGET_B = 8 * 1024 * 1024         # target working set of the normalize kernel


def _divisors_desc(n):
    return [d for d in range(n, 0, -1) if n % d == 0]


def _pick_tr(Hp, Wp, Cin, Cout, in_bytes, budget):
    """Pooled rows per grid step for kernel A, sized against a VMEM budget."""
    HWp = Hp * Wp
    valid = [tr for tr in _divisors_desc(Hp)
             if (tr * Wp) % 8 == 0 or tr * Wp == HWp]
    assert valid, "no valid pooled-row tile"
    for tr in valid:                       # descending -> largest tile that fits
        Q = tr * Wp
        est = (2 * 4 * (tr + 1) * (Wp + 1) * Cin * in_bytes   # dbl-buffered main+halo
               + 2 * 9 * Cin * Cout * in_bytes                # weight matrix
               + 16 * Q * Cin * in_bytes                      # hoisted source slabs
               + 2 * Q * 9 * Cin * in_bytes                   # live im2col slab(s)
               + 3 * Q * Cout * 4                             # conv result + running max
               + 2 * Q * Cout * 4)                            # pooled output block
        if est <= budget:
            return tr
    return valid[-1]


def _pick_tpb(HWp, Cout, budget):
    """Pooled pixels per grid step for kernel B (lane-dense transposed store)."""
    cands = [d for d in _divisors_desc(HWp) if d % 128 == 0]
    for d in cands:
        if 4 * d * Cout * 4 <= budget:     # ~2x in + 2x out double-buffered blocks
            return d
    return cands[-1] if cands else HWp


def unit_forward(x_nchw, conv_w, conv_b, bn_gamma, bn_beta, *,
                 tr=None, tpb=None,
                 compute_dtype=jnp.float32, pooled_dtype=jnp.float32):
    """Forward of `Unit` (training mode): (N, Cin, H, W) -> (N, Cout, H//2, W//2)."""
    N, Cin, H, W = x_nchw.shape
    Cout = conv_w.shape[0]
    # TODO(synk): odd spatial shapes would need masked partial blocks; even H/W
    # (the module's intended use) is covered.
    assert H % 2 == 0 and W % 2 == 0, (H, W)
    Hp, Wp = H // 2, W // 2
    HWp = Hp * Wp
    in_bytes = jnp.dtype(compute_dtype).itemsize

    if tr is None:                          # pooled rows per conv-kernel grid step
        tr = _pick_tr(Hp, Wp, Cin, Cout, in_bytes, _BUDGET_A)
    Q = tr * Wp                             # matmul M rows per phase
    assert Hp % tr == 0 and (Q % 8 == 0 or Q == HWp), (Hp, tr, Q)
    n_jp = Hp // tr

    if tpb is None:                         # pooled pixels per normalize grid step
        tpb = _pick_tpb(HWp, Cout, _BUDGET_B)
    assert HWp % tpb == 0 and (tpb % 128 == 0 or tpb == HWp), (HWp, tpb)
    n_pb = HWp // tpb
    K9 = 9 * Cin

    # ---------------- wrapper glue (input-sized, cheap): layout prep -----------
    # NHWC + zero pad, then split into the 4 (row parity, col parity) phases at
    # half resolution, stacked into a single operand: every in-kernel pooling/tap
    # selection becomes a unit-stride slice (no strided / interleaved vreg ops)
    # and only 2 DMAs (main block + 1-row halo) are issued per grid step.
    x = jnp.transpose(x_nchw, (0, 2, 3, 1)).astype(compute_dtype)     # NHWC
    xp = jnp.pad(x, ((0, 0), (1, 1), (1, 1), (0, 0)))                 # (N, H+2, W+2, Cin)
    xph = jnp.stack([xp[:, 0::2, 0::2], xp[:, 0::2, 1::2],
                     xp[:, 1::2, 0::2], xp[:, 1::2, 1::2]],
                    axis=1)                                           # (N,4,Hp+1,Wp+1,Cin)

    # (Cout, Cin, 3, 3) -> (9*Cin, Cout) im2col weight; K order = (dy, dx, cin).
    # Conv bias dropped: max(x+b) = max(x)+b and training-mode BN subtracts the
    # per-channel mean, so the constant cancels exactly in this forward pass.
    del conv_b
    w_mat = jnp.transpose(conv_w, (2, 3, 1, 0)).reshape(K9, Cout).astype(compute_dtype)

    # ---------------- kernel A: conv(3x3) + maxpool(2x2) + BN partial stats ----
    def conv_pool_stats_kernel(xm_ref, xh_ref, w_ref, pooled_ref, psum_ref, psq_ref):
        xm = xm_ref[0]                       # (4, tr, Wp+1, Cin)  block phase rows
        xh = xh_ref[0]                       # (4, 1,  Wp+1, Cin)  one halo row/phase
        # 16 distinct shifted source slabs, built once per grid step (hoisted).
        src = {}
        for p in range(4):                   # p = row_parity*2 + col_parity
            win = {0: xm[p]}
            win[1] = xh[p] if tr == 1 else jnp.concatenate([xm[p, 1:], xh[p]], axis=0)
            for ro in (0, 1):
                for co in (0, 1):
                    src[(p, ro, co)] = win[ro][:, co:co + Wp, :]    # (tr, Wp, Cin)
        w = w_ref[...]
        pooled = None
        for pi in range(2):                  # pooling-window row position
            for pj in range(2):              # pooling-window col position
                pieces = []
                for dy in range(3):
                    for dx in range(3):
                        s, t = pi + dy, pj + dx
                        pieces.append(src[((s % 2) * 2 + (t % 2), s // 2, t // 2)])
                # One big-K matmul per phase instead of nine K=Cin matmuls.
                slab = jnp.concatenate(pieces, axis=-1).reshape(Q, K9)
                conv = jnp.dot(slab, w, preferred_element_type=jnp.float32)
                pooled = conv if pooled is None else jnp.maximum(pooled, conv)
        pooled_ref[0] = pooled.astype(pooled_ref.dtype)              # (Q, Cout)
        psum_ref[0, 0] = jnp.sum(pooled, axis=0, keepdims=True)      # (1, Cout)
        psq_ref[0, 0] = jnp.sum(pooled * pooled, axis=0, keepdims=True)

    pooled, psum, psq = pl.pallas_call(
        conv_pool_stats_kernel,
        out_shape=(
            jax.ShapeDtypeStruct((N, HWp, Cout), pooled_dtype),
            jax.ShapeDtypeStruct((N, n_jp, 1, Cout), jnp.float32),
            jax.ShapeDtypeStruct((N, n_jp, 1, Cout), jnp.float32),
        ),
        grid=(N, n_jp),
        in_specs=[
            pl.BlockSpec((1, 4, tr, Wp + 1, Cin), lambda n, j: (n, 0, j, 0, 0)),
            pl.BlockSpec((1, 4, 1, Wp + 1, Cin),
                         lambda n, j: (n, 0, tr * (j + 1), 0, 0)),
            pl.BlockSpec((K9, Cout), lambda n, j: (0, 0)),
        ],
        out_specs=(
            pl.BlockSpec((1, Q, Cout), lambda n, j: (n, j, 0)),
            pl.BlockSpec((1, 1, 1, Cout), lambda n, j: (n, j, 0, 0)),
            pl.BlockSpec((1, 1, 1, Cout), lambda n, j: (n, j, 0, 0)),
        ),
        compiler_params=pltpu.CompilerParams(
            dimension_semantics=("parallel", "parallel"),
            vmem_limit_bytes=_VMEM_LIMIT),
    )(xph, xph, w_mat)

    # ---------------- finalize BN statistics (O(Cout) XLA glue) ----------------
    count = float(N * HWp)
    mean = jnp.sum(psum, axis=(0, 1)) / count                         # (1, Cout)
    var = jnp.maximum(jnp.sum(psq, axis=(0, 1)) / count - mean * mean, 0.0)
    scale = bn_gamma.reshape(1, Cout).astype(jnp.float32) * jax.lax.rsqrt(var + 1e-5)
    shift = bn_beta.reshape(1, Cout).astype(jnp.float32) - mean * scale

    # ---------------- kernel B: BN apply + ReLU + fused NHWC->NCHW transpose ---
    def bn_relu_t_kernel(p_ref, scale_ref, shift_ref, o_ref):
        y = p_ref[0].astype(jnp.float32) * scale_ref[...] + shift_ref[...]
        y = jnp.maximum(y, 0.0)
        o_ref[0] = y.T.astype(o_ref.dtype)           # lane-dense (Cout, tpb) store

    out = pl.pallas_call(
        bn_relu_t_kernel,
        out_shape=jax.ShapeDtypeStruct((N, Cout, HWp), jnp.float32),
        grid=(N, n_pb),
        in_specs=[
            pl.BlockSpec((1, tpb, Cout), lambda n, i: (n, i, 0)),
            pl.BlockSpec((1, Cout), lambda n, i: (0, 0)),
            pl.BlockSpec((1, Cout), lambda n, i: (0, 0)),
        ],
        out_specs=pl.BlockSpec((1, Cout, tpb), lambda n, i: (n, 0, i)),
        compiler_params=pltpu.CompilerParams(
            dimension_semantics=("parallel", "parallel"),
            vmem_limit_bytes=_VMEM_LIMIT),
    )(pooled, scale, shift)

    return out.reshape(N, Cout, Hp, Wp)                # NCHW, free reshape


# -------------------------------------------------------------------------------
# Pure-JAX reference (same semantics as the PyTorch module in training mode)
# -------------------------------------------------------------------------------
def unit_reference(x, conv_w, conv_b, gamma, beta):
    out = jax.lax.conv_general_dilated(
        x, conv_w, window_strides=(1, 1), padding=((1, 1), (1, 1)),
        dimension_numbers=("NCHW", "OIHW", "NCHW"),
        precision=jax.lax.Precision.HIGHEST,
    )
    out = out + conv_b.reshape(1, -1, 1, 1)
    out = jax.lax.reduce_window(
        out, -jnp.inf, jax.lax.max, (1, 1, 2, 2), (1, 1, 2, 2), "VALID")
    mean = jnp.mean(out, axis=(0, 2, 3), keepdims=True)
    var = jnp.mean((out - mean) ** 2, axis=(0, 2, 3), keepdims=True)
    out = (out - mean) * jax.lax.rsqrt(var + 1e-5)
    out = out * gamma.reshape(1, -1, 1, 1) + beta.reshape(1, -1, 1, 1)
    return jnp.maximum(out, 0.0)


if __name__ == "__main__":
    key = jax.random.PRNGKey(0)
    k1, k2, k3, k4, k5 = jax.random.split(key, 5)

    N, Cin, H, W, Cout = 2, 4, 16, 16, 8
    x = jax.random.normal(k1, (N, Cin, H, W), jnp.float32)
    conv_w = jax.random.normal(k2, (Cout, Cin, 3, 3), jnp.float32) / jnp.sqrt(9.0 * Cin)
    conv_b = 0.1 * jax.random.normal(k3, (Cout,), jnp.float32)
    gamma = 1.0 + 0.1 * jax.random.normal(k4, (Cout,), jnp.float32)
    beta = 0.1 * jax.random.normal(k5, (Cout,), jnp.float32)

    ref = unit_reference(x, conv_w, conv_b, gamma, beta)

    # Default (largest-fitting) tiles.
    out = jax.block_until_ready(unit_forward(x, conv_w, conv_b, gamma, beta))
    assert out.shape == (N, Cout, H // 2, W // 2), out.shape
    err = float(jnp.max(jnp.abs(out - ref)))
    assert err < 2e-3, f"mismatch vs reference (default tiles): {err}"

    # Small row tiles: exercises the halo path and the per-block stats reduction.
    out2 = jax.block_until_ready(unit_forward(x, conv_w, conv_b, gamma, beta, tr=2))
    err2 = float(jnp.max(jnp.abs(out2 - ref)))
    assert err2 < 2e-3, f"mismatch vs reference (small row tiles): {err2}"

    # bf16 conv inputs (f32 accumulation): halves input HBM/VMEM traffic.
    out3 = jax.block_until_ready(
        unit_forward(x, conv_w, conv_b, gamma, beta, compute_dtype=jnp.bfloat16))
    err3 = float(jnp.max(jnp.abs(out3 - ref)))
    assert err3 < 5e-2, f"mismatch vs reference (bf16 compute): {err3}"

    # Larger spatial case: multi-block normalize pass (128-wide lane-dense
    # transposed stores) and non-power-of-two Cin.
    N2, Cin2, H2, W2, Cout2 = 1, 3, 32, 32, 16
    kk = jax.random.split(jax.random.PRNGKey(1), 5)
    x2 = jax.random.normal(kk[0], (N2, Cin2, H2, W2), jnp.float32)
    w2 = jax.random.normal(kk[1], (Cout2, Cin2, 3, 3), jnp.float32) / jnp.sqrt(9.0 * Cin2)
    b2 = 0.1 * jax.random.normal(kk[2], (Cout2,), jnp.float32)
    g2 = 1.0 + 0.1 * jax.random.normal(kk[3], (Cout2,), jnp.float32)
    be2 = 0.1 * jax.random.normal(kk[4], (Cout2,), jnp.float32)
    ref2 = unit_reference(x2, w2, b2, g2, be2)
    out4 = jax.block_until_ready(unit_forward(x2, w2, b2, g2, be2, tr=8, tpb=128))
    err4 = float(jnp.max(jnp.abs(out4 - ref2)))
    assert err4 < 2e-3, f"mismatch vs reference (32x32 case): {err4}"

    print("KERNEL_OK")
</pallas_src>

<mosaic_0001>
module attributes {stable_mosaic.version = 11 : i64} {
  func.func @conv_pool_stats_kernel(%arg0: i32, %arg1: i32, %arg2: memref<1x4x8x9x4xf32, #tpu.memory_space<vmem>>, %arg3: memref<1x4x1x9x4xf32, #tpu.memory_space<vmem>>, %arg4: memref<36x8xf32, #tpu.memory_space<vmem>>, %arg5: memref<1x64x8xf32, #tpu.memory_space<vmem>>, %arg6: memref<1x1x1x8xf32, #tpu.memory_space<vmem>>, %arg7: memref<1x1x1x8xf32, #tpu.memory_space<vmem>>) attributes {dimension_semantics = [#tpu.dimension_semantics<parallel>, #tpu.dimension_semantics<parallel>], iteration_bounds = array<i64: 2, 1>, scalar_prefetch = 0 : i64, scratch_operands = 0 : i64, tpu.core_type = #tpu.core_type<tc>, window_params = [{transform_indices = @transform_0, window_bounds = array<i64: 1, 4, 8, 9, 4>}, {transform_indices = @transform_1, window_bounds = array<i64: 1, 4, 1, 9, 4>}, {pipeline_mode = #tpu.pipeline_mode<synchronous>, transform_indices = @transform_2, window_bounds = array<i64: 36, 8>}, {transform_indices = @transform_3, window_bounds = array<i64: 1, 64, 8>}, {transform_indices = @transform_4, window_bounds = array<i64: 1, 1, 1, 8>}, {transform_indices = @transform_5, window_bounds = array<i64: 1, 1, 1, 8>}]} {
    %c0 = arith.constant 0 : index
    %c0_0 = arith.constant 0 : index
    %c0_1 = arith.constant 0 : index
    %c0_2 = arith.constant 0 : index
    %c0_3 = arith.constant 0 : index
    %0 = vector.load %arg2[%c0, %c0_0, %c0_1, %c0_2, %c0_3] : memref<1x4x8x9x4xf32, #tpu.memory_space<vmem>>, vector<1x4x8x9x4xf32>
    %1 = vector.shape_cast %0 : vector<1x4x8x9x4xf32> to vector<4x8x9x4xf32>
    %c0_4 = arith.constant 0 : index
    %c0_5 = arith.constant 0 : index
    %c0_6 = arith.constant 0 : index
    %c0_7 = arith.constant 0 : index
    %c0_8 = arith.constant 0 : index
    %2 = vector.load %arg3[%c0_4, %c0_5, %c0_6, %c0_7, %c0_8] : memref<1x4x1x9x4xf32, #tpu.memory_space<vmem>>, vector<1x4x1x9x4xf32>
    %3 = vector.shape_cast %2 : vector<1x4x1x9x4xf32> to vector<4x1x9x4xf32>
    %4 = vector.extract_strided_slice %1 {offsets = [0, 0, 0, 0], sizes = [1, 8, 9, 4], strides = [1, 1, 1, 1]} : vector<4x8x9x4xf32> to vector<1x8x9x4xf32>
    %5 = vector.shape_cast %4 : vector<1x8x9x4xf32> to vector<8x9x4xf32>
    %6 = vector.extract_strided_slice %1 {offsets = [0, 1, 0, 0], sizes = [1, 7, 9, 4], strides = [1, 1, 1, 1]} : vector<4x8x9x4xf32> to vector<1x7x9x4xf32>
    %7 = vector.shape_cast %6 : vector<1x7x9x4xf32> to vector<7x9x4xf32>
    %8 = vector.extract_strided_slice %3 {offsets = [0, 0, 0, 0], sizes = [1, 1, 9, 4], strides = [1, 1, 1, 1]} : vector<4x1x9x4xf32> to vector<1x1x9x4xf32>
    %9 = vector.shape_cast %8 : vector<1x1x9x4xf32> to vector<1x9x4xf32>
    %10 = tpu.concatenate %7, %9 in 0 : vector<7x9x4xf32>, vector<1x9x4xf32> -> vector<8x9x4xf32>
    %11 = vector.extract_strided_slice %5 {offsets = [0, 0, 0], sizes = [8, 8, 4], strides = [1, 1, 1]} : vector<8x9x4xf32> to vector<8x8x4xf32>
    %12 = vector.extract_strided_slice %5 {offsets = [0, 1, 0], sizes = [8, 8, 4], strides = [1, 1, 1]} : vector<8x9x4xf32> to vector<8x8x4xf32>
    %13 = vector.extract_strided_slice %10 {offsets = [0, 0, 0], sizes = [8, 8, 4], strides = [1, 1, 1]} : vector<8x9x4xf32> to vector<8x8x4xf32>
    %14 = vector.extract_strided_slice %10 {offsets = [0, 1, 0], sizes = [8, 8, 4], strides = [1, 1, 1]} : vector<8x9x4xf32> to vector<8x8x4xf32>
    %15 = vector.extract_strided_slice %1 {offsets = [1, 0, 0, 0], sizes = [1, 8, 9, 4], strides = [1, 1, 1, 1]} : vector<4x8x9x4xf32> to vector<1x8x9x4xf32>
    %16 = vector.shape_cast %15 : vector<1x8x9x4xf32> to vector<8x9x4xf32>
    %17 = vector.extract_strided_slice %1 {offsets = [1, 1, 0, 0], sizes = [1, 7, 9, 4], strides = [1, 1, 1, 1]} : vector<4x8x9x4xf32> to vector<1x7x9x4xf32>
    %18 = vector.shape_cast %17 : vector<1x7x9x4xf32> to vector<7x9x4xf32>
    %19 = vector.extract_strided_slice %3 {offsets = [1, 0, 0, 0], sizes = [1, 1, 9, 4], strides = [1, 1, 1, 1]} : vector<4x1x9x4xf32> to vector<1x1x9x4xf32>
    %20 = vector.shape_cast %19 : vector<1x1x9x4xf32> to vector<1x9x4xf32>
    %21 = tpu.concatenate %18, %20 in 0 : vector<7x9x4xf32>, vector<1x9x4xf32> -> vector<8x9x4xf32>
    %22 = vector.extract_strided_slice %16 {offsets = [0, 0, 0], sizes = [8, 8, 4], strides = [1, 1, 1]} : vector<8x9x4xf32> to vector<8x8x4xf32>
    %23 = vector.extract_strided_slice %16 {offsets = [0, 1, 0], sizes = [8, 8, 4], strides = [1, 1, 1]} : vector<8x9x4xf32> to vector<8x8x4xf32>
    %24 = vector.extract_strided_slice %21 {offsets = [0, 0, 0], sizes = [8, 8, 4], strides = [1, 1, 1]} : vector<8x9x4xf32> to vector<8x8x4xf32>
    %25 = vector.extract_strided_slice %21 {offsets = [0, 1, 0], sizes = [8, 8, 4], strides = [1, 1, 1]} : vector<8x9x4xf32> to vector<8x8x4xf32>
    %26 = vector.extract_strided_slice %1 {offsets = [2, 0, 0, 0], sizes = [1, 8, 9, 4], strides = [1, 1, 1, 1]} : vector<4x8x9x4xf32> to vector<1x8x9x4xf32>
    %27 = vector.shape_cast %26 : vector<1x8x9x4xf32> to vector<8x9x4xf32>
    %28 = vector.extract_strided_slice %1 {offsets = [2, 1, 0, 0], sizes = [1, 7, 9, 4], strides = [1, 1, 1, 1]} : vector<4x8x9x4xf32> to vector<1x7x9x4xf32>
    %29 = vector.shape_cast %28 : vector<1x7x9x4xf32> to vector<7x9x4xf32>
    %30 = vector.extract_strided_slice %3 {offsets = [2, 0, 0, 0], sizes = [1, 1, 9, 4], strides = [1, 1, 1, 1]} : vector<4x1x9x4xf32> to vector<1x1x9x4xf32>
    %31 = vector.shape_cast %30 : vector<1x1x9x4xf32> to vector<1x9x4xf32>
    %32 = tpu.concatenate %29, %31 in 0 : vector<7x9x4xf32>, vector<1x9x4xf32> -> vector<8x9x4xf32>
    %33 = vector.extract_strided_slice %27 {offsets = [0, 0, 0], sizes = [8, 8, 4], strides = [1, 1, 1]} : vector<8x9x4xf32> to vector<8x8x4xf32>
    %34 = vector.extract_strided_slice %27 {offsets = [0, 1, 0], sizes = [8, 8, 4], strides = [1, 1, 1]} : vector<8x9x4xf32> to vector<8x8x4xf32>
    %35 = vector.extract_strided_slice %32 {offsets = [0, 0, 0], sizes = [8, 8, 4], strides = [1, 1, 1]} : vector<8x9x4xf32> to vector<8x8x4xf32>
    %36 = vector.extract_strided_slice %32 {offsets = [0, 1, 0], sizes = [8, 8, 4], strides = [1, 1, 1]} : vector<8x9x4xf32> to vector<8x8x4xf32>
    %37 = vector.extract_strided_slice %1 {offsets = [3, 0, 0, 0], sizes = [1, 8, 9, 4], strides = [1, 1, 1, 1]} : vector<4x8x9x4xf32> to vector<1x8x9x4xf32>
    %38 = vector.shape_cast %37 : vector<1x8x9x4xf32> to vector<8x9x4xf32>
    %39 = vector.extract_strided_slice %1 {offsets = [3, 1, 0, 0], sizes = [1, 7, 9, 4], strides = [1, 1, 1, 1]} : vector<4x8x9x4xf32> to vector<1x7x9x4xf32>
    %40 = vector.shape_cast %39 : vector<1x7x9x4xf32> to vector<7x9x4xf32>
    %41 = vector.extract_strided_slice %3 {offsets = [3, 0, 0, 0], sizes = [1, 1, 9, 4], strides = [1, 1, 1, 1]} : vector<4x1x9x4xf32> to vector<1x1x9x4xf32>
    %42 = vector.shape_cast %41 : vector<1x1x9x4xf32> to vector<1x9x4xf32>
    %43 = tpu.concatenate %40, %42 in 0 : vector<7x9x4xf32>, vector<1x9x4xf32> -> vector<8x9x4xf32>
    %44 = vector.extract_strided_slice %38 {offsets = [0, 0, 0], sizes = [8, 8, 4], strides = [1, 1, 1]} : vector<8x9x4xf32> to vector<8x8x4xf32>
    %45 = vector.extract_strided_slice %38 {offsets = [0, 1, 0], sizes = [8, 8, 4], strides = [1, 1, 1]} : vector<8x9x4xf32> to vector<8x8x4xf32>
    %46 = vector.extract_strided_slice %43 {offsets = [0, 0, 0], sizes = [8, 8, 4], strides = [1, 1, 1]} : vector<8x9x4xf32> to vector<8x8x4xf32>
    %47 = vector.extract_strided_slice %43 {offsets = [0, 1, 0], sizes = [8, 8, 4], strides = [1, 1, 1]} : vector<8x9x4xf32> to vector<8x8x4xf32>
    %c0_9 = arith.constant 0 : index
    %c0_10 = arith.constant 0 : index
    %48 = vector.load %arg4[%c0_9, %c0_10] : memref<36x8xf32, #tpu.memory_space<vmem>>, vector<36x8xf32>
    %49 = tpu.concatenate %11, %22, %12, %33, %44, %34, %13, %24, %14 in 2 : vector<8x8x4xf32>, vector<8x8x4xf32>, vector<8x8x4xf32>, vector<8x8x4xf32>, vector<8x8x4xf32>, vector<8x8x4xf32>, vector<8x8x4xf32>, vector<8x8x4xf32>, vector<8x8x4xf32> -> vector<8x8x36xf32>
    %50 = vector.shape_cast %49 : vector<8x8x36xf32> to vector<64x36xf32>
    %cst = arith.constant dense<0.000000e+00> : vector<64x8xf32>
    %51 = tpu.matmul %50, %48, %cst {dimension_numbers = #tpu.dot_dimension_numbers<[1], [0], [0], [1], [0, 0, 1, 1], [], []>} : vector<64x36xf32>, vector<36x8xf32>, vector<64x8xf32> -> vector<64x8xf32>
    %52 = tpu.concatenate %22, %12, %23, %44, %34, %45, %24, %14, %25 in 2 : vector<8x8x4xf32>, vector<8x8x4xf32>, vector<8x8x4xf32>, vector<8x8x4xf32>, vector<8x8x4xf32>, vector<8x8x4xf32>, vector<8x8x4xf32>, vector<8x8x4xf32>, vector<8x8x4xf32> -> vector<8x8x36xf32>
    %53 = vector.shape_cast %52 : vector<8x8x36xf32> to vector<64x36xf32>
    %cst_11 = arith.constant dense<0.000000e+00> : vector<64x8xf32>
    %54 = tpu.matmul %53, %48, %cst_11 {dimension_numbers = #tpu.dot_dimension_numbers<[1], [0], [0], [1], [0, 0, 1, 1], [], []>} : vector<64x36xf32>, vector<36x8xf32>, vector<64x8xf32> -> vector<64x8xf32>
    %55 = arith.maximumf %51, %54 : vector<64x8xf32>
    %56 = tpu.concatenate %33, %44, %34, %13, %24, %14, %35, %46, %36 in 2 : vector<8x8x4xf32>, vector<8x8x4xf32>, vector<8x8x4xf32>, vector<8x8x4xf32>, vector<8x8x4xf32>, vector<8x8x4xf32>, vector<8x8x4xf32>, vector<8x8x4xf32>, vector<8x8x4xf32> -> vector<8x8x36xf32>
    %57 = vector.shape_cast %56 : vector<8x8x36xf32> to vector<64x36xf32>
    %cst_12 = arith.constant dense<0.000000e+00> : vector<64x8xf32>
    %58 = tpu.matmul %57, %48, %cst_12 {dimension_numbers = #tpu.dot_dimension_numbers<[1], [0], [0], [1], [0, 0, 1, 1], [], []>} : vector<64x36xf32>, vector<36x8xf32>, vector<64x8xf32> -> vector<64x8xf32>
    %59 = arith.maximumf %55, %58 : vector<64x8xf32>
    %60 = tpu.concatenate %44, %34, %45, %24, %14, %25, %46, %36, %47 in 2 : vector<8x8x4xf32>, vector<8x8x4xf32>, vector<8x8x4xf32>, vector<8x8x4xf32>, vector<8x8x4xf32>, vector<8x8x4xf32>, vector<8x8x4xf32>, vector<8x8x4xf32>, vector<8x8x4xf32> -> vector<8x8x36xf32>
    %61 = vector.shape_cast %60 : vector<8x8x36xf32> to vector<64x36xf32>
    %cst_13 = arith.constant dense<0.000000e+00> : vector<64x8xf32>
    %62 = tpu.matmul %61, %48, %cst_13 {dimension_numbers = #tpu.dot_dimension_numbers<[1], [0], [0], [1], [0, 0, 1, 1], [], []>} : vector<64x36xf32>, vector<36x8xf32>, vector<64x8xf32> -> vector<64x8xf32>
    %63 = arith.maximumf %59, %62 : vector<64x8xf32>
    %c0_14 = arith.constant 0 : index
    %c0_15 = arith.constant 0 : index
    %c0_16 = arith.constant 0 : index
    %64 = vector.load %arg5[%c0_14, %c0_15, %c0_16] : memref<1x64x8xf32, #tpu.memory_space<vmem>>, vector<1x64x8xf32>
    %65 = vector.shape_cast %64 : vector<1x64x8xf32> to vector<64x8xf32>
    %66 = vector.shape_cast %63 : vector<64x8xf32> to vector<1x64x8xf32>
    tpu.vector_store %arg5[%c0_14, %c0_15, %c0_16], %66 {strides = array<i32>} : memref<1x64x8xf32, #tpu.memory_space<vmem>>, vector<1x64x8xf32>,
    %cst_17 = arith.constant dense<0.000000e+00> : vector<8xf32>
    %67 = vector.multi_reduction <add>, %63, %cst_17 [0] : vector<64x8xf32> to vector<8xf32>
    %68 = vector.shape_cast %67 : vector<8xf32> to vector<1x8xf32>
    %c0_18 = arith.constant 0 : index
    %c0_19 = arith.constant 0 : index
    %c0_20 = arith.constant 0 : index
    %c0_21 = arith.constant 0 : index
    %69 = vector.load %arg6[%c0_18, %c0_19, %c0_20, %c0_21] : memref<1x1x1x8xf32, #tpu.memory_space<vmem>>, vector<1x1x1x8xf32>
    %70 = vector.shape_cast %69 : vector<1x1x1x8xf32> to vector<1x8xf32>
    %71 = vector.shape_cast %68 : vector<1x8xf32> to vector<1x1x1x8xf32>
    tpu.vector_store %arg6[%c0_18, %c0_19, %c0_20, %c0_21], %71 {strides = array<i32>} : memref<1x1x1x8xf32, #tpu.memory_space<vmem>>, vector<1x1x1x8xf32>,
    %72 = arith.mulf %63, %63 : vector<64x8xf32>
    %cst_22 = arith.constant dense<0.000000e+00> : vector<8xf32>
    %73 = vector.multi_reduction <add>, %72, %cst_22 [0] : vector<64x8xf32> to vector<8xf32>
    %74 = vector.shape_cast %73 : vector<8xf32> to vector<1x8xf32>
    %c0_23 = arith.constant 0 : index
    %c0_24 = arith.constant 0 : index
    %c0_25 = arith.constant 0 : index
    %c0_26 = arith.constant 0 : index
    %75 = vector.load %arg7[%c0_23, %c0_24, %c0_25, %c0_26] : memref<1x1x1x8xf32, #tpu.memory_space<vmem>>, vector<1x1x1x8xf32>
    %76 = vector.shape_cast %75 : vector<1x1x1x8xf32> to vector<1x8xf32>
    %77 = vector.shape_cast %74 : vector<1x8xf32> to vector<1x1x1x8xf32>
    tpu.vector_store %arg7[%c0_23, %c0_24, %c0_25, %c0_26], %77 {strides = array<i32>} : memref<1x1x1x8xf32, #tpu.memory_space<vmem>>, vector<1x1x1x8xf32>,
    return
  }
  func.func @transform_0(%arg0: i32, %arg1: i32) -> (i32, i32, i32, i32, i32) {
    %c0_i32 = arith.constant 0 : i32
    %c0_i32_0 = arith.constant 0 : i32
    %c0_i32_1 = arith.constant 0 : i32
    %c0_i32_2 = arith.constant 0 : i32
    return %arg0, %c0_i32, %arg1, %c0_i32_0, %c0_i32_1 : i32, i32, i32, i32, i32
  }
  func.func @transform_1(%arg0: i32, %arg1: i32) -> (i32, i32, i32, i32, i32) {
    %c1_i32 = arith.constant 1 : i32
    %0 = arith.addi %arg1, %c1_i32 : i32
    %c8_i32 = arith.constant 8 : i32
    %1 = arith.muli %c8_i32, %0 : i32
    %c0_i32 = arith.constant 0 : i32
    %c0_i32_0 = arith.constant 0 : i32
    %c0_i32_1 = arith.constant 0 : i32
    %c0_i32_2 = arith.constant 0 : i32
    return %arg0, %c0_i32, %1, %c0_i32_0, %c0_i32_1 : i32, i32, i32, i32, i32
  }
  func.func @transform_2(%arg0: i32, %arg1: i32) -> (i32, i32) {
    %c0_i32 = arith.constant 0 : i32
    %c0_i32_0 = arith.constant 0 : i32
    %c0_i32_1 = arith.constant 0 : i32
    return %c0_i32, %c0_i32_0 : i32, i32
  }
  func.func @transform_3(%arg0: i32, %arg1: i32) -> (i32, i32, i32) {
    %c0_i32 = arith.constant 0 : i32
    %c0_i32_0 = arith.constant 0 : i32
    return %arg0, %arg1, %c0_i32 : i32, i32, i32
  }
  func.func @transform_4(%arg0: i32, %arg1: i32) -> (i32, i32, i32, i32) {
    %c0_i32 = arith.constant 0 : i32
    %c0_i32_0 = arith.constant 0 : i32
    %c0_i32_1 = arith.constant 0 : i32
    return %arg0, %arg1, %c0_i32, %c0_i32_0 : i32, i32, i32, i32
  }
  func.func @transform_5(%arg0: i32, %arg1: i32) -> (i32, i32, i32, i32) {
    %c0_i32 = arith.constant 0 : i32
    %c0_i32_0 = arith.constant 0 : i32
    %c0_i32_1 = arith.constant 0 : i32
    return %arg0, %arg1, %c0_i32, %c0_i32_0 : i32, i32, i32, i32
  }
}

</mosaic_0001>

<llo_original>
// kernel: tpu_custom_call.1
$region0: #{tpu_custom_call.1}
  #allocation0 [shape = 'u32[]', space=smem, size = 0x4, offset = 0x4, fixed_abs, tag = 'smem constant byte address 0x4 - core index']
  #allocation1 [shape = 'u32[144,128]{1,0:T(1,128)}', space=vmem, size = 0x12000, scoped, tag = 'internal scratch']
  %s0 = inlined_call_operand.vmem [shape: f32[2,4,9,9,4], index: 0, kind: input, shape index: {}]
  %s1 = inlined_call_operand.vmem [shape: f32[2,4,9,9,4], index: 1, kind: input, shape index: {}]
  %s2 = inlined_call_operand.vmem [shape: f32[36,8], index: 2, kind: input, shape index: {}]
  %s3 = inlined_call_operand.vmem [shape: f32[2,64,8], index: 3, kind: output, shape index: {0}]
  %s4 = inlined_call_operand.hbm [shape: f32[2,1,1,8], index: 4, kind: output, shape index: {1}]
  %s5 = inlined_call_operand.hbm [shape: f32[2,1,1,8], index: 5, kind: output, shape index: {2}]
  %6 = xla_tuple %s3, %s4, %s5
  %s7 = sld [smem:[#allocation0]]
  $region151: #{tpu_custom_call.1} parent=0
    _
  %s9 = ssub.s32 1, %s7
  %s10 = scalar_select 0, %s9, %s7
  $region1: #{tpu_custom_call.1} parent=0
    #allocation2 [shape = 'u8[524288]{0}', space=vmem, size = 0x80000, scoped, tag = 'input window, operand 0']
    #allocation3 [shape = 'u8[65536]{0}', space=vmem, size = 0x10000, scoped, tag = 'input window, operand 1']
    #allocation4 [shape = 'u8[1024]{0}', space=vmem, size = 0x400, scoped, tag = 'output window, operand 1']
    #allocation5 [shape = 's32[2]{0}', space=sflag, size = 0x8, scoped, tag = 'scoped memory for tpu_custom_call.1']
    #allocation6 [shape = 'u8[1024]{0}', space=vmem, size = 0x400, scoped, tag = 'output window, operand 2']
    #allocation7 [shape = 's32[2]{0}', space=sflag, size = 0x8, scoped, tag = 'scoped memory for tpu_custom_call.1']
    %11 = vsyncpa [#allocation5], 0
    %s12 = scalar_lea.sflag [#allocation5], 1
    %13 = vsyncpa %s12, 0
    %14 = vsyncpa [#allocation7], 0
    %s15 = scalar_lea.sflag [#allocation7], 1
    %16 = vsyncpa %s15, 0
    loop: start=0, step=1, limit=4
    $region2: #{tpu_custom_call.1} parent=1 // loop_pre_header
      _
    $region3: #{tpu_custom_call.1} parent=1 // loop_header
      %s18 = sphi 0, %s22
      %p19 = scmp.ge.s32.totalorder %s18, 4
      %s25 = sphi 0, %s37
      %s26 = sphi 0, %s33
      %s27 = sphi 0, %s25
      %s28 = sphi 0, %s26
      %s29 = sphi 0, %s27
      %s30 = sphi 0, %s28
      %s42 = sphi 0, %s44
      %s45 = sphi 0, %s42
      %s46 = sphi 0, %s45
      %s62 = sphi 0, %s46
      %s74 = sphi 0, %s76
      %s77 = sphi 0, %s74
      %s78 = sphi 0, %s77
      %s94 = sphi 0, %s78
      %s98 = sphi 0, %s98
      %s100 = sphi 0, %s98
      %s101 = sphi 0, %s100
      %s115 = sphi 0, %s101
      %s123 = sphi 0, %s125
      %s126 = sphi 0, %s123
      %s127 = sphi 0, %s126
      %s143 = sphi 0, %s127
      %s151 = sphi 0, %s153
      %s154 = sphi 0, %s151
      %s155 = sphi 0, %s154
      %s171 = sphi 0, %s155
      %s179 = sphi 0, %s181
      %s182 = sphi 0, %s179
      %s183 = sphi 0, %s182
      %s199 = sphi 0, %s183
    $region4: #{tpu_custom_call.1} parent=1 // loop_header_branch
      %21 = sbr.rel (%p19) target = $region8
    $region5: #{tpu_custom_call.1} parent=1 // loop_body
      %s23 = ssub.s32 %s18, 1
      %s24 = ssub.s32 %s18, 2
      %s31 = sadd.s32 1, %s26
      %p32 = scmp.ge.s32.totalorder %s31, 1
      %s33 = scalar_select %p32, 0, %s31
      %s34 = sadd.s32 1, %s25
      %s35 = scalar_select %p32, %s34, %s25
      %p36 = scmp.ge.s32.totalorder %s35, 2
      %s37 = scalar_select %p36, 0, %s35
      %s38 = ssub.s32 %s25, %s37
      %s39 = ssub.s32 %s26, %s33
      %s40 = sor.u32 %s38, %s39
      %p41 = scmp.eq.s32.totalorder %s40, 0
      %s43 = sadd.s32 %s42, 1
      %s44 = scalar_select %p41, %s42, %s43
      %p47 = pneg %p41
      %p48 = scmp.eq.s32.totalorder %s18, 1
      %p49 = por %p47, %p48
      %p50 = scmp.ne.s32.totalorder %s42, %s45
      %p51 = scmp.eq.s32.totalorder %s18, 0
      %p52 = por %p50, %p51
      %p53 = scmp.ne.s32.totalorder %s42, %s45
      %p54 = scmp.eq.s32.totalorder %s23, 1
      %p55 = por %p53, %p54
      %p56 = scmp.ne.s32.totalorder %s45, %s46
      %p57 = scmp.eq.s32.totalorder %s23, 0
      %p58 = por %p56, %p57
      %p59 = scmp.ne.s32.totalorder %s45, %s46
      %p60 = scmp.eq.s32.totalorder %s24, 1
      %p61 = por %p59, %p60
      %p63 = scmp.ne.s32.totalorder %s46, %s62
      %p64 = scmp.eq.s32.totalorder %s24, 0
      %p65 = por %p63, %p64
      %s66 = sadd.s32 %s26, 1
      %s67 = smul.u32 %s66, 8
      %s68 = sadd.s32 %s33, 1
      %s69 = smul.u32 %s68, 8
      %s70 = ssub.s32 %s25, %s37
      %s71 = ssub.s32 %s67, %s69
      %s72 = sor.u32 %s70, %s71
      %p73 = scmp.eq.s32.totalorder %s72, 0
      %s75 = sadd.s32 %s74, 1
      %s76 = scalar_select %p73, %s74, %s75
      %p79 = pneg %p73
      %p80 = scmp.eq.s32.totalorder %s18, 1
      %p81 = por %p79, %p80
      %p82 = scmp.ne.s32.totalorder %s74, %s77
      %p83 = scmp.eq.s32.totalorder %s18, 0
      %p84 = por %p82, %p83
      %p85 = scmp.ne.s32.totalorder %s74, %s77
      %p86 = scmp.eq.s32.totalorder %s23, 1
      %p87 = por %p85, %p86
      %p88 = scmp.ne.s32.totalorder %s77, %s78
      %p89 = scmp.eq.s32.totalorder %s23, 0
      %p90 = por %p88, %p89
      %p91 = scmp.ne.s32.totalorder %s77, %s78
      %p92 = scmp.eq.s32.totalorder %s24, 1
      %p93 = por %p91, %p92
      %p95 = scmp.ne.s32.totalorder %s78, %s94
      %p96 = scmp.eq.s32.totalorder %s24, 0
      %p97 = por %p95, %p96
      %s99 = sadd.s32 %s98, 1
      %p102 = scmp.eq.s32.totalorder %s18, 1
      %p103 = scmp.ne.s32.totalorder %s98, %s100
      %p104 = scmp.eq.s32.totalorder %s18, 0
      %p105 = por %p103, %p104
      %p106 = scmp.ne.s32.totalorder %s98, %s100
      %p107 = scmp.eq.s32.totalorder %s23, 1
      %p108 = por %p106, %p107
      %p109 = scmp.ne.s32.totalorder %s100, %s101
      %p110 = scmp.eq.s32.totalorder %s23, 0
      %p111 = por %p109, %p110
      %p112 = scmp.ne.s32.totalorder %s100, %s101
      %p113 = scmp.eq.s32.totalorder %s24, 1
      %p114 = por %p112, %p113
      %p116 = scmp.ne.s32.totalorder %s101, %s115
      %p117 = scmp.eq.s32.totalorder %s24, 0
      %p118 = por %p116, %p117
      %s119 = ssub.s32 %s25, %s37
      %s120 = ssub.s32 %s26, %s33
      %s121 = sor.u32 %s119, %s120
      %p122 = scmp.eq.s32.totalorder %s121, 0
      %s124 = sadd.s32 %s123, 1
      %s125 = scalar_select %p122, %s123, %s124
      %p128 = pneg %p122
      %p129 = scmp.eq.s32.totalorder %s18, 1
      %p130 = por %p128, %p129
      %p131 = scmp.ne.s32.totalorder %s123, %s126
      %p132 = scmp.eq.s32.totalorder %s18, 0
      %p133 = por %p131, %p132
      %p134 = scmp.ne.s32.totalorder %s123, %s126
      %p135 = scmp.eq.s32.totalorder %s23, 1
      %p136 = por %p134, %p135
      %p137 = scmp.ne.s32.totalorder %s126, %s127
      %p138 = scmp.eq.s32.totalorder %s23, 0
      %p139 = por %p137, %p138
      %p140 = scmp.ne.s32.totalorder %s126, %s127
      %p141 = scmp.eq.s32.totalorder %s24, 1
      %p142 = por %p140, %p141
      %p144 = scmp.ne.s32.totalorder %s127, %s143
      %p145 = scmp.eq.s32.totalorder %s24, 0
      %p146 = por %p144, %p145
      %s147 = ssub.s32 %s25, %s37
      %s148 = ssub.s32 %s26, %s33
      %s149 = sor.u32 %s147, %s148
      %p150 = scmp.eq.s32.totalorder %s149, 0
      %s152 = sadd.s32 %s151, 1
      %s153 = scalar_select %p150, %s151, %s152
      %p156 = pneg %p150
      %p157 = scmp.eq.s32.totalorder %s18, 1
      %p158 = por %p156, %p157
      %p159 = scmp.ne.s32.totalorder %s151, %s154
      %p160 = scmp.eq.s32.totalorder %s18, 0
      %p161 = por %p159, %p160
      %p162 = scmp.ne.s32.totalorder %s151, %s154
      %p163 = scmp.eq.s32.totalorder %s23, 1
      %p164 = por %p162, %p163
      %p165 = scmp.ne.s32.totalorder %s154, %s155
      %p166 = scmp.eq.s32.totalorder %s23, 0
      %p167 = por %p165, %p166
      %p168 = scmp.ne.s32.totalorder %s154, %s155
      %p169 = scmp.eq.s32.totalorder %s24, 1
      %p170 = por %p168, %p169
      %p172 = scmp.ne.s32.totalorder %s155, %s171
      %p173 = scmp.eq.s32.totalorder %s24, 0
      %p174 = por %p172, %p173
      %s175 = ssub.s32 %s25, %s37
      %s176 = ssub.s32 %s26, %s33
      %s177 = sor.u32 %s175, %s176
      %p178 = scmp.eq.s32.totalorder %s177, 0
      %s180 = sadd.s32 %s179, 1
      %s181 = scalar_select %p178, %s179, %s180
      %p184 = pneg %p178
      %p185 = scmp.eq.s32.totalorder %s18, 1
      %p186 = por %p184, %p185
      %p187 = scmp.ne.s32.totalorder %s179, %s182
      %p188 = scmp.eq.s32.totalorder %s18, 0
      %p189 = por %p187, %p188
      %p190 = scmp.ne.s32.totalorder %s179, %s182
      %p191 = scmp.eq.s32.totalorder %s23, 1
      %p192 = por %p190, %p191
      %p193 = scmp.ne.s32.totalorder %s182, %s183
      %p194 = scmp.eq.s32.totalorder %s23, 0
      %p195 = por %p193, %p194
      %p196 = scmp.ne.s32.totalorder %s182, %s183
      %p197 = scmp.eq.s32.totalorder %s24, 1
      %p198 = por %p196, %p197
      %p200 = scmp.ne.s32.totalorder %s183, %s199
      %p201 = scmp.eq.s32.totalorder %s24, 0
      %p202 = por %p200, %p201
      %p203 = scmp.le.s32.totalorder 1, %s18
      %p204 = scmp.lt.s32.totalorder %s18, 3
      %p205 = pnand %p203, %p204
      %p206 = pneg %p205
      // Predicated region
      $region9: #{tpu_custom_call.1} parent=5 // pred_check
        _
      $region10: #{tpu_custom_call.1} parent=5 // pred_check_branch
        %208 = sbr.rel (%p205) target = $region12
      $region11: #{tpu_custom_call.1} parent=5 // pred_region
        %s209 = ssub.s32 %s18, 1
        // Predicated region
        $region13: #{tpu_custom_call.1} parent=11 // pred_check
          %p210 = pneg %p111
        $region14: #{tpu_custom_call.1} parent=11 // pred_check_branch
          %212 = sbr.rel (%p210) target = $region16
        $region15: #{tpu_custom_call.1} parent=11 // pred_region
          _
        $region16: #{tpu_custom_call.1} parent=11 // pred_fallthru
          _
      $region12: #{tpu_custom_call.1} parent=5 // pred_fallthru
        _
      %p213 = scmp.lt.s32.totalorder %s18, 2
      // Predicated region
      $region17: #{tpu_custom_call.1} parent=5 // pred_check
        %p214 = pneg %p213
      $region18: #{tpu_custom_call.1} parent=5 // pred_check_branch
        %216 = sbr.rel (%p214) target = $region20
      $region19: #{tpu_custom_call.1} parent=5 // pred_region
        // Predicated region
        $region21: #{tpu_custom_call.1} parent=19 // pred_check
          %p217 = pneg %p52
        $region22: #{tpu_custom_call.1} parent=19 // pred_check_branch
          %219 = sbr.rel (%p217) target = $region24
        $region23: #{tpu_custom_call.1} parent=19 // pred_region
          %s220 = sand.u32 %s42, 1
          %s221 = sand.u32 %s42, 1
          %s222 = smul.addr %s221, 512
          %s223 = scalar_lea.vmem [#allocation2], %s222
          %s224 = smul.u32 8, %s26
          %s225 = ssub.s32 9, %s224
          %p226 = scmp.lt.s32.totalorder %s225, 8
          %s227 = scalar_select %p226, %s225, 8
          %s228 = smul.u32 512, %s227
          %s229 = smul.u32 %s228, 2
          %p230 = scmp.ne.s32.totalorder 0, %s229
          %s231 = smul.addr %s224, 2
          %s232 = smul.addr %s25, 72
          %s233 = sadd.s32 %s231, %s232
          %s234 = smul.addr %s233, 8
          %s235 = scalar_lea.vmem %s0, %s234
          %s236 = smul.u32 %s227, 2
          // Predicated region
          $region25: #{tpu_custom_call.1} parent=23 // pred_check
            %p237 = pneg %p230
          $region26: #{tpu_custom_call.1} parent=23 // pred_check_branch
            %239 = sbr.rel (%p237) target = $region28
          $region27: #{tpu_custom_call.1} parent=23 // pred_region
            // Predicated region
            $region29: #{tpu_custom_call.1} parent=27 // pred_check
              _
            $region30: #{tpu_custom_call.1} parent=27 // pred_check_branch
              %241 = sbr.rel (0) target = $region32
            $region31: #{tpu_custom_call.1} parent=27 // pred_region
              // Predicated region
              $region51: #{tpu_custom_call.1} parent=31 // pred_check
                _
              $region52: #{tpu_custom_call.1} parent=31 // pred_check_branch
                %422 = sbr.rel (0) target = $region54
              $region53: #{tpu_custom_call.1} parent=31 // pred_region
                %s423 = sshrl.u32 %s236, 4
                // While loop
                $region55: #{tpu_custom_call.1} parent=53 // loop_pre_header
                  _
                $region56: #{tpu_custom_call.1} parent=53 // loop_header
                  %s425 = sphi 0, %s427
                  %p426 = scmp.ge.s32.totalorder %s425, %s423
                  %s430 = sphi 0, %s563
                  %s431 = sphi %s235, %s566
                  %s432 = sphi %s223, %s567
                $region57: #{tpu_custom_call.1} parent=53 // loop_header_branch
                  %429 = sbr.rel (%p426) target = $region61
                $region58: #{tpu_custom_call.1} parent=53 // loop_body
                  %v433 = vld [vmem:[%s431] sm:$0xff]
                  %434 = vst [vmem:[%s432] sm:$0xff] %v433
                  %v435 = vld [vmem:[%s431 + $0x8] sm:$0xff]
                  %436 = vst [vmem:[%s432 + $0x8] sm:$0xff] %v435
                  %v437 = vld [vmem:[%s431 + $0x10] sm:$0xff]
                  %438 = vst [vmem:[%s432 + $0x10] sm:$0xff] %v437
                  %v439 = vld [vmem:[%s431 + $0x18] sm:$0xff]
                  %440 = vst [vmem:[%s432 + $0x18] sm:$0xff] %v439
                  %v441 = vld [vmem:[%s431 + $0x20] sm:$0xff]
                  %442 = vst [vmem:[%s432 + $0x20] sm:$0xff] %v441
                  %v443 = vld [vmem:[%s431 + $0x28] sm:$0xff]
                  %444 = vst [vmem:[%s432 + $0x28] sm:$0xff] %v443
                  %v445 = vld [vmem:[%s431 + $0x30] sm:$0xff]
                  %446 = vst [vmem:[%s432 + $0x30] sm:$0xff] %v445
                  %v447 = vld [vmem:[%s431 + $0x38] sm:$0xff]
                  %448 = vst [vmem:[%s432 + $0x38] sm:$0xff] %v447
                  %v449 = vld [vmem:[%s431 + $0x40] sm:$0xff]
                  %450 = vst [vmem:[%s432 + $0x40] sm:$0xff] %v449
                  %v451 = vld [vmem:[%s431 + $0x48] sm:$0xff]
                  %452 = vst [vmem:[%s432 + $0x48] sm:$0xff] %v451
                  %v453 = vld [vmem:[%s431 + $0x50] sm:$0xff]
                  %454 = vst [vmem:[%s432 + $0x50] sm:$0xff] %v453
                  %v455 = vld [vmem:[%s431 + $0x58] sm:$0xff]
                  %456 = vst [vmem:[%s432 + $0x58] sm:$0xff] %v455
                  %v457 = vld [vmem:[%s431 + $0x60] sm:$0xff]
                  %458 = vst [vmem:[%s432 + $0x60] sm:$0xff] %v457
                  %v459 = vld [vmem:[%s431 + $0x68] sm:$0xff]
                  %460 = vst [vmem:[%s432 + $0x68] sm:$0xff] %v459
                  %v461 = vld [vmem:[%s431 + $0x70] sm:$0xff]
                  %462 = vst [vmem:[%s432 + $0x70] sm:$0xff] %v461
                  %v463 = vld [vmem:[%s431 + $0x78] sm:$0xff]
                  %464 = vst [vmem:[%s432 + $0x78] sm:$0xff] %v463
                  %v465 = vld [vmem:[%s431 + $0x90] sm:$0xff]
                  %466 = vst [vmem:[%s432 + $0x80] sm:$0xff] %v465
                  %v467 = vld [vmem:[%s431 + $0x98] sm:$0xff]
                  %468 = vst [vmem:[%s432 + $0x88] sm:$0xff] %v467
                  %v469 = vld [vmem:[%s431 + $0xa0] sm:$0xff]
                  %470 = vst [vmem:[%s432 + $0x90] sm:$0xff] %v469
                  %v471 = vld [vmem:[%s431 + $0xa8] sm:$0xff]
                  %472 = vst [vmem:[%s432 + $0x98] sm:$0xff] %v471
                  %v473 = vld [vmem:[%s431 + $0xb0] sm:$0xff]
                  %474 = vst [vmem:[%s432 + $0xa0] sm:$0xff] %v473
                  %v475 = vld [vmem:[%s431 + $0xb8] sm:$0xff]
                  %476 = vst [vmem:[%s432 + $0xa8] sm:$0xff] %v475
                  %v477 = vld [vmem:[%s431 + $0xc0] sm:$0xff]
                  %478 = vst [vmem:[%s432 + $0xb0] sm:$0xff] %v477
                  %v479 = vld [vmem:[%s431 + $0xc8] sm:$0xff]
                  %480 = vst [vmem:[%s432 + $0xb8] sm:$0xff] %v479
                  %v481 = vld [vmem:[%s431 + $0xd0] sm:$0xff]
                  %482 = vst [vmem:[%s432 + $0xc0] sm:$0xff] %v481
                  %v483 = vld [vmem:[%s431 + $0xd8] sm:$0xff]
                  %484 = vst [vmem:[%s432 + $0xc8] sm:$0xff] %v483
                  %v485 = vld [vmem:[%s431 + $0xe0] sm:$0xff]
                  %486 = vst [vmem:[%s432 + $0xd0] sm:$0xff] %v485
                  %v487 = vld [vmem:[%s431 + $0xe8] sm:$0xff]
                  %488 = vst [vmem:[%s432 + $0xd8] sm:$0xff] %v487
                  %v489 = vld [vmem:[%s431 + $0xf0] sm:$0xff]
                  %490 = vst [vmem:[%s432 + $0xe0] sm:$0xff] %v489
                  %v491 = vld [vmem:[%s431 + $0xf8] sm:$0xff]
                  %492 = vst [vmem:[%s432 + $0xe8] sm:$0xff] %v491
                  %v493 = vld [vmem:[%s431 + $0x100] sm:$0xff]
                  %494 = vst [vmem:[%s432 + $0xf0] sm:$0xff] %v493
                  %v495 = vld [vmem:[%s431 + $0x108] sm:$0xff]
                  %496 = vst [vmem:[%s432 + $0xf8] sm:$0xff] %v495
                  %v497 = vld [vmem:[%s431 + $0x120] sm:$0xff]
                  %498 = vst [vmem:[%s432 + $0x100] sm:$0xff] %v497
                  %v499 = vld [vmem:[%s431 + $0x128] sm:$0xff]
                  %500 = vst [vmem:[%s432 + $0x108] sm:$0xff] %v499
                  %v501 = vld [vmem:[%s431 + $0x130] sm:$0xff]
                  %502 = vst [vmem:[%s432 + $0x110] sm:$0xff] %v501
                  %v503 = vld [vmem:[%s431 + $0x138] sm:$0xff]
                  %504 = vst [vmem:[%s432 + $0x118] sm:$0xff] %v503
                  %v505 = vld [vmem:[%s431 + $0x140] sm:$0xff]
                  %506 = vst [vmem:[%s432 + $0x120] sm:$0xff] %v505
                  %v507 = vld [vmem:[%s431 + $0x148] sm:$0xff]
                  %508 = vst [vmem:[%s432 + $0x128] sm:$0xff] %v507
                  %v509 = vld [vmem:[%s431 + $0x150] sm:$0xff]
                  %510 = vst [vmem:[%s432 + $0x130] sm:$0xff] %v509
                  %v511 = vld [vmem:[%s431 + $0x158] sm:$0xff]
                  %512 = vst [vmem:[%s432 + $0x138] sm:$0xff] %v511
                  %v513 = vld [vmem:[%s431 + $0x160] sm:$0xff]
                  %514 = vst [vmem:[%s432 + $0x140] sm:$0xff] %v513
                  %v515 = vld [vmem:[%s431 + $0x168] sm:$0xff]
                  %516 = vst [vmem:[%s432 + $0x148] sm:$0xff] %v515
                  %v517 = vld [vmem:[%s431 + $0x170] sm:$0xff]
                  %518 = vst [vmem:[%s432 + $0x150] sm:$0xff] %v517
                  %v519 = vld [vmem:[%s431 + $0x178] sm:$0xff]
                  %520 = vst [vmem:[%s432 + $0x158] sm:$0xff] %v519
                  %v521 = vld [vmem:[%s431 + $0x180] sm:$0xff]
                  %522 = vst [vmem:[%s432 + $0x160] sm:$0xff] %v521
                  %v523 = vld [vmem:[%s431 + $0x188] sm:$0xff]
                  %524 = vst [vmem:[%s432 + $0x168] sm:$0xff] %v523
                  %v525 = vld [vmem:[%s431 + $0x190] sm:$0xff]
                  %526 = vst [vmem:[%s432 + $0x170] sm:$0xff] %v525
                  %v527 = vld [vmem:[%s431 + $0x198] sm:$0xff]
                  %528 = vst [vmem:[%s432 + $0x178] sm:$0xff] %v527
                  %v529 = vld [vmem:[%s431 + $0x1b0] sm:$0xff]
                  %530 = vst [vmem:[%s432 + $0x180] sm:$0xff] %v529
                  %v531 = vld [vmem:[%s431 + $0x1b8] sm:$0xff]
                  %532 = vst [vmem:[%s432 + $0x188] sm:$0xff] %v531
                  %v533 = vld [vmem:[%s431 + $0x1c0] sm:$0xff]
                  %534 = vst [vmem:[%s432 + $0x190] sm:$0xff] %v533
                  %v535 = vld [vmem:[%s431 + $0x1c8] sm:$0xff]
                  %536 = vst [vmem:[%s432 + $0x198] sm:$0xff] %v535
                  %v537 = vld [vmem:[%s431 + $0x1d0] sm:$0xff]
                  %538 = vst [vmem:[%s432 + $0x1a0] sm:$0xff] %v537
                  %v539 = vld [vmem:[%s431 + $0x1d8] sm:$0xff]
                  %540 = vst [vmem:[%s432 + $0x1a8] sm:$0xff] %v539
                  %v541 = vld [vmem:[%s431 + $0x1e0] sm:$0xff]
                  %542 = vst [vmem:[%s432 + $0x1b0] sm:$0xff] %v541
                  %v543 = vld [vmem:[%s431 + $0x1e8] sm:$0xff]
                  %544 = vst [vmem:[%s432 + $0x1b8] sm:$0xff] %v543
                  %v545 = vld [vmem:[%s431 + $0x1f0] sm:$0xff]
                  %546 = vst [vmem:[%s432 + $0x1c0] sm:$0xff] %v545
                  %v547 = vld [vmem:[%s431 + $0x1f8] sm:$0xff]
                  %548 = vst [vmem:[%s432 + $0x1c8] sm:$0xff] %v547
                  %v549 = vld [vmem:[%s431 + $0x200] sm:$0xff]
                  %550 = vst [vmem:[%s432 + $0x1d0] sm:$0xff] %v549
                  %v551 = vld [vmem:[%s431 + $0x208] sm:$0xff]
                  %552 = vst [vmem:[%s432 + $0x1d8] sm:$0xff] %v551
                  %v553 = vld [vmem:[%s431 + $0x210] sm:$0xff]
                  %554 = vst [vmem:[%s432 + $0x1e0] sm:$0xff] %v553
                  %v555 = vld [vmem:[%s431 + $0x218] sm:$0xff]
                  %556 = vst [vmem:[%s432 + $0x1e8] sm:$0xff] %v555
                  %v557 = vld [vmem:[%s431 + $0x220] sm:$0xff]
                  %558 = vst [vmem:[%s432 + $0x1f0] sm:$0xff] %v557
                  %v559 = vld [vmem:[%s431 + $0x228] sm:$0xff]
                  %560 = vst [vmem:[%s432 + $0x1f8] sm:$0xff] %v559
                  %s561 = sadd.s32 1, %s430
                  %p562 = scmp.ge.s32.totalorder %s561, %s423
                  %s563 = scalar_select %p562, 0, %s561
                  %s564 = smul.u32 %s563, 128
                  %s565 = smul.u32 %s563, 128
                  %s566 = scalar_lea.vmem %s235, %s564
                  %s567 = scalar_lea.vmem %s223, %s565 [#allocation2]
                $region59: #{tpu_custom_call.1} parent=53 // loop_footer
                  %s427 = sadd.s32 %s425, 1
                $region60: #{tpu_custom_call.1} parent=53 // loop_footer_branch
                  %424 = sbr.rel target = $region56
                $region61: #{tpu_custom_call.1} parent=53 // loop_exit
                  _
                %s568 = sshrl.u32 %s236, 4
                %s569 = sand.u32 %s236, 15
                %s570 = smul.u32 %s568, 16
                %s571 = smul.u32 8, %s570
                %s572 = scalar_lea.vmem %s235, %s571
                %s573 = smul.u32 8, %s570
                %s574 = scalar_lea.vmem %s223, %s573 [#allocation2]
                // While loop
                $region62: #{tpu_custom_call.1} parent=53 // loop_pre_header
                  _
                $region63: #{tpu_custom_call.1} parent=53 // loop_header
                  %s576 = sphi 0, %s578
                  %p577 = scmp.ge.s32.totalorder %s576, %s569
                  %s581 = sphi 0, %s594
                  %s582 = sphi %s572, %s597
                  %s583 = sphi %s574, %s598
                $region64: #{tpu_custom_call.1} parent=53 // loop_header_branch
                  %580 = sbr.rel (%p577) target = $region68
                $region65: #{tpu_custom_call.1} parent=53 // loop_body
                  %v584 = vld [vmem:[%s582] sm:$0xff]
                  %585 = vst [vmem:[%s583] sm:$0xff] %v584
                  %v586 = vld [vmem:[%s582 + $0x90] sm:$0xff]
                  %587 = vst [vmem:[%s583 + $0x80] sm:$0xff] %v586
                  %v588 = vld [vmem:[%s582 + $0x120] sm:$0xff]
                  %589 = vst [vmem:[%s583 + $0x100] sm:$0xff] %v588
                  %v590 = vld [vmem:[%s582 + $0x1b0] sm:$0xff]
                  %591 = vst [vmem:[%s583 + $0x180] sm:$0xff] %v590
                  %s592 = sadd.s32 1, %s581
                  %p593 = scmp.ge.s32.totalorder %s592, %s569
                  %s594 = scalar_select %p593, 0, %s592
                  %s595 = smul.u32 %s594, 8
                  %s596 = smul.u32 %s594, 8
                  %s597 = scalar_lea.vmem %s572, %s595
                  %s598 = scalar_lea.vmem %s574, %s596 [#allocation2]
                $region66: #{tpu_custom_call.1} parent=53 // loop_footer
                  %s578 = sadd.s32 %s576, 1
                $region67: #{tpu_custom_call.1} parent=53 // loop_footer_branch
                  %575 = sbr.rel target = $region63
                $region68: #{tpu_custom_call.1} parent=53 // loop_exit
                  _
              $region54: #{tpu_custom_call.1} parent=31 // pred_fallthru
                _
              // Predicated region
              $region69: #{tpu_custom_call.1} parent=31 // pred_check
                _
              $region70: #{tpu_custom_call.1} parent=31 // pred_check_branch
                %600 = sbr.rel target = $region72
              $region71: #{tpu_custom_call.1} parent=31 // pred_region
                _
              $region72: #{tpu_custom_call.1} parent=31 // pred_fallthru
                _
            $region32: #{tpu_custom_call.1} parent=27 // pred_fallthru
              _
            // Predicated region
            $region33: #{tpu_custom_call.1} parent=27 // pred_check
              _
            $region34: #{tpu_custom_call.1} parent=27 // pred_check_branch
              %243 = sbr.rel target = $region36
            $region35: #{tpu_custom_call.1} parent=27 // pred_region
              %s245 = sshrl.u32 %s236, 4
              // While loop
              $region37: #{tpu_custom_call.1} parent=35 // loop_pre_header
                _
              $region38: #{tpu_custom_call.1} parent=35 // loop_header
                %s247 = sphi 0, %s249
                %p248 = scmp.ge.s32.totalorder %s247, %s245
                %s252 = sphi 0, %s385
                %s253 = sphi %s235, %s388
                %s254 = sphi %s223, %s389
              $region39: #{tpu_custom_call.1} parent=35 // loop_header_branch
                %251 = sbr.rel (%p248) target = $region43
              $region40: #{tpu_custom_call.1} parent=35 // loop_body
                %v255 = vld [vmem:[%s253] sm:$0xff]
                %256 = vst [vmem:[%s254] sm:$0xff] %v255
                %v257 = vld [vmem:[%s253 + $0x8] sm:$0xff]
                %258 = vst [vmem:[%s254 + $0x8] sm:$0xff] %v257
                %v259 = vld [vmem:[%s253 + $0x10] sm:$0xff]
                %260 = vst [vmem:[%s254 + $0x10] sm:$0xff] %v259
                %v261 = vld [vmem:[%s253 + $0x18] sm:$0xff]
                %262 = vst [vmem:[%s254 + $0x18] sm:$0xff] %v261
                %v263 = vld [vmem:[%s253 + $0x20] sm:$0xff]
                %264 = vst [vmem:[%s254 + $0x20] sm:$0xff] %v263
                %v265 = vld [vmem:[%s253 + $0x28] sm:$0xff]
                %266 = vst [vmem:[%s254 + $0x28] sm:$0xff] %v265
                %v267 = vld [vmem:[%s253 + $0x30] sm:$0xff]
                %268 = vst [vmem:[%s254 + $0x30] sm:$0xff] %v267
                %v269 = vld [vmem:[%s253 + $0x38] sm:$0xff]
                %270 = vst [vmem:[%s254 + $0x38] sm:$0xff] %v269
                %v271 = vld [vmem:[%s253 + $0x40] sm:$0xff]
                %272 = vst [vmem:[%s254 + $0x40] sm:$0xff] %v271
                %v273 = vld [vmem:[%s253 + $0x48] sm:$0xff]
                %274 = vst [vmem:[%s254 + $0x48] sm:$0xff] %v273
                %v275 = vld [vmem:[%s253 + $0x50] sm:$0xff]
                %276 = vst [vmem:[%s254 + $0x50] sm:$0xff] %v275
                %v277 = vld [vmem:[%s253 + $0x58] sm:$0xff]
                %278 = vst [vmem:[%s254 + $0x58] sm:$0xff] %v277
                %v279 = vld [vmem:[%s253 + $0x60] sm:$0xff]
                %280 = vst [vmem:[%s254 + $0x60] sm:$0xff] %v279
                %v281 = vld [vmem:[%s253 + $0x68] sm:$0xff]
                %282 = vst [vmem:[%s254 + $0x68] sm:$0xff] %v281
                %v283 = vld [vmem:[%s253 + $0x70] sm:$0xff]
                %284 = vst [vmem:[%s254 + $0x70] sm:$0xff] %v283
                %v285 = vld [vmem:[%s253 + $0x78] sm:$0xff]
                %286 = vst [vmem:[%s254 + $0x78] sm:$0xff] %v285
                %v287 = vld [vmem:[%s253 + $0x90] sm:$0xff]
                %288 = vst [vmem:[%s254 + $0x80] sm:$0xff] %v287
                %v289 = vld [vmem:[%s253 + $0x98] sm:$0xff]
                %290 = vst [vmem:[%s254 + $0x88] sm:$0xff] %v289
                %v291 = vld [vmem:[%s253 + $0xa0] sm:$0xff]
                %292 = vst [vmem:[%s254 + $0x90] sm:$0xff] %v291
                %v293 = vld [vmem:[%s253 + $0xa8] sm:$0xff]
                %294 = vst [vmem:[%s254 + $0x98] sm:$0xff] %v293
                %v295 = vld [vmem:[%s253 + $0xb0] sm:$0xff]
                %296 = vst [vmem:[%s254 + $0xa0] sm:$0xff] %v295
                %v297 = vld [vmem:[%s253 + $0xb8] sm:$0xff]
                %298 = vst [vmem:[%s254 + $0xa8] sm:$0xff] %v297
                %v299 = vld [vmem:[%s253 + $0xc0] sm:$0xff]
                %300 = vst [vmem:[%s254 + $0xb0] sm:$0xff] %v299
                %v301 = vld [vmem:[%s253 + $0xc8] sm:$0xff]
                %302 = vst [vmem:[%s254 + $0xb8] sm:$0xff] %v301
                %v303 = vld [vmem:[%s253 + $0xd0] sm:$0xff]
                %304 = vst [vmem:[%s254 + $0xc0] sm:$0xff] %v303
                %v305 = vld [vmem:[%s253 + $0xd8] sm:$0xff]
                %306 = vst [vmem:[%s254 + $0xc8] sm:$0xff] %v305
                %v307 = vld [vmem:[%s253 + $0xe0] sm:$0xff]
                %308 = vst [vmem:[%s254 + $0xd0] sm:$0xff] %v307
                %v309 = vld [vmem:[%s253 + $0xe8] sm:$0xff]
                %310 = vst [vmem:[%s254 + $0xd8] sm:$0xff] %v309
                %v311 = vld [vmem:[%s253 + $0xf0] sm:$0xff]
                %312 = vst [vmem:[%s254 + $0xe0] sm:$0xff] %v311
                %v313 = vld [vmem:[%s253 + $0xf8] sm:$0xff]
                %314 = vst [vmem:[%s254 + $0xe8] sm:$0xff] %v313
                %v315 = vld [vmem:[%s253 + $0x100] sm:$0xff]
                %316 = vst [vmem:[%s254 + $0xf0] sm:$0xff] %v315
                %v317 = vld [vmem:[%s253 + $0x108] sm:$0xff]
                %318 = vst [vmem:[%s254 + $0xf8] sm:$0xff] %v317
                %v319 = vld [vmem:[%s253 + $0x120] sm:$0xff]
                %320 = vst [vmem:[%s254 + $0x100] sm:$0xff] %v319
                %v321 = vld [vmem:[%s253 + $0x128] sm:$0xff]
                %322 = vst [vmem:[%s254 + $0x108] sm:$0xff] %v321
                %v323 = vld [vmem:[%s253 + $0x130] sm:$0xff]
                %324 = vst [vmem:[%s254 + $0x110] sm:$0xff] %v323
                %v325 = vld [vmem:[%s253 + $0x138] sm:$0xff]
                %326 = vst [vmem:[%s254 + $0x118] sm:$0xff] %v325
                %v327 = vld [vmem:[%s253 + $0x140] sm:$0xff]
                %328 = vst [vmem:[%s254 + $0x120] sm:$0xff] %v327
                %v329 = vld [vmem:[%s253 + $0x148] sm:$0xff]
                %330 = vst [vmem:[%s254 + $0x128] sm:$0xff] %v329
                %v331 = vld [vmem:[%s253 + $0x150] sm:$0xff]
                %332 = vst [vmem:[%s254 + $0x130] sm:$0xff] %v331
                %v333 = vld [vmem:[%s253 + $0x158] sm:$0xff]
                %334 = vst [vmem:[%s254 + $0x138] sm:$0xff] %v333
                %v335 = vld [vmem:[%s253 + $0x160] sm:$0xff]
                %336 = vst [vmem:[%s254 + $0x140] sm:$0xff] %v335
                %v337 = vld [vmem:[%s253 + $0x168] sm:$0xff]
                %338 = vst [vmem:[%s254 + $0x148] sm:$0xff] %v337
                %v339 = vld [vmem:[%s253 + $0x170] sm:$0xff]
                %340 = vst [vmem:[%s254 + $0x150] sm:$0xff] %v339
                %v341 = vld [vmem:[%s253 + $0x178] sm:$0xff]
                %342 = vst [vmem:[%s254 + $0x158] sm:$0xff] %v341
                %v343 = vld [vmem:[%s253 + $0x180] sm:$0xff]
                %344 = vst [vmem:[%s254 + $0x160] sm:$0xff] %v343
                %v345 = vld [vmem:[%s253 + $0x188] sm:$0xff]
                %346 = vst [vmem:[%s254 + $0x168] sm:$0xff] %v345
                %v347 = vld [vmem:[%s253 + $0x190] sm:$0xff]
                %348 = vst [vmem:[%s254 + $0x170] sm:$0xff] %v347
                %v349 = vld [vmem:[%s253 + $0x198] sm:$0xff]
                %350 = vst [vmem:[%s254 + $0x178] sm:$0xff] %v349
                %v351 = vld [vmem:[%s253 + $0x1b0] sm:$0xff]
                %352 = vst [vmem:[%s254 + $0x180] sm:$0xff] %v351
                %v353 = vld [vmem:[%s253 + $0x1b8] sm:$0xff]
                %354 = vst [vmem:[%s254 + $0x188] sm:$0xff] %v353
                %v355 = vld [vmem:[%s253 + $0x1c0] sm:$0xff]
                %356 = vst [vmem:[%s254 + $0x190] sm:$0xff] %v355
                %v357 = vld [vmem:[%s253 + $0x1c8] sm:$0xff]
                %358 = vst [vmem:[%s254 + $0x198] sm:$0xff] %v357
                %v359 = vld [vmem:[%s253 + $0x1d0] sm:$0xff]
                %360 = vst [vmem:[%s254 + $0x1a0] sm:$0xff] %v359
                %v361 = vld [vmem:[%s253 + $0x1d8] sm:$0xff]
                %362 = vst [vmem:[%s254 + $0x1a8] sm:$0xff] %v361
                %v363 = vld [vmem:[%s253 + $0x1e0] sm:$0xff]
                %364 = vst [vmem:[%s254 + $0x1b0] sm:$0xff] %v363
                %v365 = vld [vmem:[%s253 + $0x1e8] sm:$0xff]
                %366 = vst [vmem:[%s254 + $0x1b8] sm:$0xff] %v365
                %v367 = vld [vmem:[%s253 + $0x1f0] sm:$0xff]
                %368 = vst [vmem:[%s254 + $0x1c0] sm:$0xff] %v367
                %v369 = vld [vmem:[%s253 + $0x1f8] sm:$0xff]
                %370 = vst [vmem:[%s254 + $0x1c8] sm:$0xff] %v369
                %v371 = vld [vmem:[%s253 + $0x200] sm:$0xff]
                %372 = vst [vmem:[%s254 + $0x1d0] sm:$0xff] %v371
                %v373 = vld [vmem:[%s253 + $0x208] sm:$0xff]
                %374 = vst [vmem:[%s254 + $0x1d8] sm:$0xff] %v373
                %v375 = vld [vmem:[%s253 + $0x210] sm:$0xff]
                %376 = vst [vmem:[%s254 + $0x1e0] sm:$0xff] %v375
                %v377 = vld [vmem:[%s253 + $0x218] sm:$0xff]
                %378 = vst [vmem:[%s254 + $0x1e8] sm:$0xff] %v377
                %v379 = vld [vmem:[%s253 + $0x220] sm:$0xff]
                %380 = vst [vmem:[%s254 + $0x1f0] sm:$0xff] %v379
                %v381 = vld [vmem:[%s253 + $0x228] sm:$0xff]
                %382 = vst [vmem:[%s254 + $0x1f8] sm:$0xff] %v381
                %s383 = sadd.s32 1, %s252
                %p384 = scmp.ge.s32.totalorder %s383, %s245
                %s385 = scalar_select %p384, 0, %s383
                %s386 = smul.u32 %s385, 128
                %s387 = smul.u32 %s385, 128
                %s388 = scalar_lea.vmem %s235, %s386
                %s389 = scalar_lea.vmem %s223, %s387 [#allocation2]
              $region41: #{tpu_custom_call.1} parent=35 // loop_footer
                %s249 = sadd.s32 %s247, 1
              $region42: #{tpu_custom_call.1} parent=35 // loop_footer_branch
                %246 = sbr.rel target = $region38
              $region43: #{tpu_custom_call.1} parent=35 // loop_exit
                _
              %s390 = sshrl.u32 %s236, 4
              %s391 = sand.u32 %s236, 15
              %s392 = smul.u32 %s390, 16
              %s393 = smul.u32 8, %s392
              %s394 = scalar_lea.vmem %s235, %s393
              %s395 = smul.u32 8, %s392
              %s396 = scalar_lea.vmem %s223, %s395 [#allocation2]
              // While loop
              $region44: #{tpu_custom_call.1} parent=35 // loop_pre_header
                _
              $region45: #{tpu_custom_call.1} parent=35 // loop_header
                %s398 = sphi 0, %s400
                %p399 = scmp.ge.s32.totalorder %s398, %s391
                %s403 = sphi 0, %s416
                %s404 = sphi %s394, %s419
                %s405 = sphi %s396, %s420
              $region46: #{tpu_custom_call.1} parent=35 // loop_header_branch
                %402 = sbr.rel (%p399) target = $region50
              $region47: #{tpu_custom_call.1} parent=35 // loop_body
                %v406 = vld [vmem:[%s404] sm:$0xff]
                %407 = vst [vmem:[%s405] sm:$0xff] %v406
                %v408 = vld [vmem:[%s404 + $0x90] sm:$0xff]
                %409 = vst [vmem:[%s405 + $0x80] sm:$0xff] %v408
                %v410 = vld [vmem:[%s404 + $0x120] sm:$0xff]
                %411 = vst [vmem:[%s405 + $0x100] sm:$0xff] %v410
                %v412 = vld [vmem:[%s404 + $0x1b0] sm:$0xff]
                %413 = vst [vmem:[%s405 + $0x180] sm:$0xff] %v412
                %s414 = sadd.s32 1, %s403
                %p415 = scmp.ge.s32.totalorder %s414, %s391
                %s416 = scalar_select %p415, 0, %s414
                %s417 = smul.u32 %s416, 8
                %s418 = smul.u32 %s416, 8
                %s419 = scalar_lea.vmem %s394, %s417
                %s420 = scalar_lea.vmem %s396, %s418 [#allocation2]
              $region48: #{tpu_custom_call.1} parent=35 // loop_footer
                %s400 = sadd.s32 %s398, 1
              $region49: #{tpu_custom_call.1} parent=35 // loop_footer_branch
                %397 = sbr.rel target = $region45
              $region50: #{tpu_custom_call.1} parent=35 // loop_exit
                _
            $region36: #{tpu_custom_call.1} parent=27 // pred_fallthru
              _
          $region28: #{tpu_custom_call.1} parent=23 // pred_fallthru
            _
          %601 = vnop
        $region24: #{tpu_custom_call.1} parent=19 // pred_fallthru
          _
        // Predicated region
        $region73: #{tpu_custom_call.1} parent=19 // pred_check
          %p602 = pneg %p84
        $region74: #{tpu_custom_call.1} parent=19 // pred_check_branch
          %604 = sbr.rel (%p602) target = $region76
        $region75: #{tpu_custom_call.1} parent=19 // pred_region
          %s605 = sand.u32 %s74, 1
          %s606 = sand.u32 %s74, 1
          %s607 = smul.addr %s606, 64
          %s608 = scalar_lea.vmem [#allocation3], %s607
          %s609 = sadd.s32 %s26, 1
          %s610 = smul.u32 %s609, 8
          %s611 = smul.addr %s610, 2
          %s612 = smul.addr %s25, 72
          %s613 = sadd.s32 %s611, %s612
          %s614 = smul.addr %s613, 8
          %s615 = scalar_lea.vmem %s1, %s614
          // Predicated region
          $region77: #{tpu_custom_call.1} parent=75 // pred_check
            _
          $region78: #{tpu_custom_call.1} parent=75 // pred_check_branch
            %617 = sbr.rel (0) target = $region80
          $region79: #{tpu_custom_call.1} parent=75 // pred_region
            // Predicated region
            $region81: #{tpu_custom_call.1} parent=79 // pred_check
              _
            $region82: #{tpu_custom_call.1} parent=79 // pred_check_branch
              %619 = sbr.rel (0) target = $region84
            $region83: #{tpu_custom_call.1} parent=79 // pred_region
              // Predicated region
              $region96: #{tpu_custom_call.1} parent=83 // pred_check
                _
              $region97: #{tpu_custom_call.1} parent=83 // pred_check_branch
                %648 = sbr.rel (0) target = $region99
              $region98: #{tpu_custom_call.1} parent=83 // pred_region
                loop: start=0, step=1, limit=1
                $region100: #{tpu_custom_call.1} parent=98 // loop_pre_header
                  _
                $region101: #{tpu_custom_call.1} parent=98 // loop_header
                  %s650 = sphi 0, %s654
                  %p651 = scmp.ge.s32.totalorder %s650, 1
                  %s655 = sphi %s615, %s615
                  %s656 = sphi %s608, %s608
                $region102: #{tpu_custom_call.1} parent=98 // loop_header_branch
                  %653 = sbr.rel (%p651) target = $region106
                $region103: #{tpu_custom_call.1} parent=98 // loop_body
                  %v657 = vld [vmem:[%s655] sm:$0xff]
                  %658 = vst [vmem:[%s656] sm:$0xff] %v657
                  %v659 = vld [vmem:[%s655 + $0x8] sm:$0xff]
                  %660 = vst [vmem:[%s656 + $0x8] sm:$0xff] %v659
                  %v661 = vld [vmem:[%s655 + $0x90] sm:$0xff]
                  %662 = vst [vmem:[%s656 + $0x10] sm:$0xff] %v661
                  %v663 = vld [vmem:[%s655 + $0x98] sm:$0xff]
                  %664 = vst [vmem:[%s656 + $0x18] sm:$0xff] %v663
                  %v665 = vld [vmem:[%s655 + $0x120] sm:$0xff]
                  %666 = vst [vmem:[%s656 + $0x20] sm:$0xff] %v665
                  %v667 = vld [vmem:[%s655 + $0x128] sm:$0xff]
                  %668 = vst [vmem:[%s656 + $0x28] sm:$0xff] %v667
                  %v669 = vld [vmem:[%s655 + $0x1b0] sm:$0xff]
                  %670 = vst [vmem:[%s656 + $0x30] sm:$0xff] %v669
                  %v671 = vld [vmem:[%s655 + $0x1b8] sm:$0xff]
                  %672 = vst [vmem:[%s656 + $0x38] sm:$0xff] %v671
                $region104: #{tpu_custom_call.1} parent=98 // loop_footer
                  %s654 = sadd.s32 1, %s650
                $region105: #{tpu_custom_call.1} parent=98 // loop_footer_branch
                  %649 = sbr.rel target = $region101
                $region106: #{tpu_custom_call.1} parent=98 // loop_exit
                  _
              $region99: #{tpu_custom_call.1} parent=83 // pred_fallthru
                _
              // Predicated region
              $region107: #{tpu_custom_call.1} parent=83 // pred_check
                _
              $region108: #{tpu_custom_call.1} parent=83 // pred_check_branch
                %674 = sbr.rel target = $region110
              $region109: #{tpu_custom_call.1} parent=83 // pred_region
                _
              $region110: #{tpu_custom_call.1} parent=83 // pred_fallthru
                _
            $region84: #{tpu_custom_call.1} parent=79 // pred_fallthru
              _
            // Predicated region
            $region85: #{tpu_custom_call.1} parent=79 // pred_check
              _
            $region86: #{tpu_custom_call.1} parent=79 // pred_check_branch
              %621 = sbr.rel target = $region88
            $region87: #{tpu_custom_call.1} parent=79 // pred_region
              loop: start=0, step=1, limit=1
              $region89: #{tpu_custom_call.1} parent=87 // loop_pre_header
                _
              $region90: #{tpu_custom_call.1} parent=87 // loop_header
                %s624 = sphi 0, %s628
                %p625 = scmp.ge.s32.totalorder %s624, 1
                %s629 = sphi %s615, %s615
                %s630 = sphi %s608, %s608
              $region91: #{tpu_custom_call.1} parent=87 // loop_header_branch
                %627 = sbr.rel (%p625) target = $region95
              $region92: #{tpu_custom_call.1} parent=87 // loop_body
                %v631 = vld [vmem:[%s629] sm:$0xff]
                %632 = vst [vmem:[%s630] sm:$0xff] %v631
                %v633 = vld [vmem:[%s629 + $0x8] sm:$0xff]
                %634 = vst [vmem:[%s630 + $0x8] sm:$0xff] %v633
                %v635 = vld [vmem:[%s629 + $0x90] sm:$0xff]
                %636 = vst [vmem:[%s630 + $0x10] sm:$0xff] %v635
                %v637 = vld [vmem:[%s629 + $0x98] sm:$0xff]
                %638 = vst [vmem:[%s630 + $0x18] sm:$0xff] %v637
                %v639 = vld [vmem:[%s629 + $0x120] sm:$0xff]
                %640 = vst [vmem:[%s630 + $0x20] sm:$0xff] %v639
                %v641 = vld [vmem:[%s629 + $0x128] sm:$0xff]
                %642 = vst [vmem:[%s630 + $0x28] sm:$0xff] %v641
                %v643 = vld [vmem:[%s629 + $0x1b0] sm:$0xff]
                %644 = vst [vmem:[%s630 + $0x30] sm:$0xff] %v643
                %v645 = vld [vmem:[%s629 + $0x1b8] sm:$0xff]
                %646 = vst [vmem:[%s630 + $0x38] sm:$0xff] %v645
              $region93: #{tpu_custom_call.1} parent=87 // loop_footer
                %s628 = sadd.s32 1, %s624
              $region94: #{tpu_custom_call.1} parent=87 // loop_footer_branch
                %623 = sbr.rel target = $region90
              $region95: #{tpu_custom_call.1} parent=87 // loop_exit
                _
            $region88: #{tpu_custom_call.1} parent=79 // pred_fallthru
              _
          $region80: #{tpu_custom_call.1} parent=75 // pred_fallthru
            _
          %675 = vnop
        $region76: #{tpu_custom_call.1} parent=19 // pred_fallthru
          _
      $region20: #{tpu_custom_call.1} parent=5 // pred_fallthru
        _
      %p676 = scmp.le.s32.totalorder 1, %s18
      %p677 = scmp.lt.s32.totalorder %s18, 3
      %p678 = pnand %p676, %p677
      %p679 = pneg %p678
      // Predicated region
      $region111: #{tpu_custom_call.1} parent=5 // pred_check
        _
      $region112: #{tpu_custom_call.1} parent=5 // pred_check_branch
        %681 = sbr.rel (%p678) target = $region114
      $region113: #{tpu_custom_call.1} parent=5 // pred_region
        %s682 = ssub.s32 %s18, 1
        %s683 = sand.u32 %s45, 1
        %s684 = sand.u32 %s45, 1
        %s685 = smul.addr %s684, 512
        %s686 = scalar_lea.vmem [#allocation2], %s685
        // Predicated region
        $region115: #{tpu_custom_call.1} parent=113 // pred_check
          %p687 = pneg %p58
        $region116: #{tpu_custom_call.1} parent=113 // pred_check_branch
          %689 = sbr.rel (%p687) target = $region118
        $region117: #{tpu_custom_call.1} parent=113 // pred_region
          _
        $region118: #{tpu_custom_call.1} parent=113 // pred_fallthru
          _
        %s690 = sand.u32 %s77, 1
        %s691 = sand.u32 %s77, 1
        %s692 = smul.addr %s691, 64
        %s693 = scalar_lea.vmem [#allocation3], %s692
        // Predicated region
        $region119: #{tpu_custom_call.1} parent=113 // pred_check
          %p694 = pneg %p90
        $region120: #{tpu_custom_call.1} parent=113 // pred_check_branch
          %696 = sbr.rel (%p694) target = $region122
        $region121: #{tpu_custom_call.1} parent=113 // pred_region
          _
        $region122: #{tpu_custom_call.1} parent=113 // pred_fallthru
          _
        %s697 = sand.u32 %s45, 1
        %s698 = sand.u32 %s45, 1
        %s699 = smul.addr %s698, 512
        %s700 = scalar_lea.vmem [#allocation2], %s699
        %p701 = pneg %p58
        %p702 = pneg %p55
        %s703 = sand.u32 %s77, 1
        %s704 = sand.u32 %s77, 1
        %s705 = smul.addr %s704, 64
        %s706 = scalar_lea.vmem [#allocation3], %s705
        %p707 = pneg %p90
        %p708 = pneg %p87
        %p709 = pneg %p111
        %p710 = pneg %p108
        %p711 = pneg %p139
        %p712 = pneg %p136
        %s713 = smul.u32 8, %s28
        %p714 = scmp.lt.s32.totalorder %s27, 1
        %s715 = scalar_select %p714, %s27, 1
        %p716 = scmp.lt.s32.totalorder %s713, 7
        %s717 = scalar_select %p716, %s713, 7
        %s718 = smul.addr %s715, 8
        %s719 = sadd.s32 %s717, %s718
        %s720 = smul.addr %s719, 8
        %s721 = scalar_lea.vmem %s3, %s720
        %p722 = pneg %p167
        %p723 = pneg %p164
        %s724 = sand.u32 %s154, 1
        %s725 = scalar_lea.sflag [#allocation5], %s724
        %s726 = sand.u32 %s154, 1
        %s727 = scalar_lea.vmem [#allocation4], %s726
        %p728 = pneg %p195
        %p729 = pneg %p192
        %s730 = sand.u32 %s182, 1
        %s731 = scalar_lea.sflag [#allocation7], %s730
        %s732 = sand.u32 %s182, 1
        %s733 = scalar_lea.vmem [#allocation6], %s732
        %s734 = smul.u32 8, %s28
        %s735 = ssub.s32 9, %s734
        %p736 = scmp.lt.s32.totalorder %s735, 8
        %s737 = scalar_select %p736, %s735, 8
        %s738 = smul.u32 512, %s737
        %s739 = smul.u32 %s738, 2
        %s740 = sadd.s32 %s28, 1
        %s741 = smul.u32 %s740, 8
        %s742 = smul.u32 8, %s28
        %p743 = scmp.lt.s32.totalorder %s27, 1
        %s744 = scalar_select %p743, %s27, 1
        %p745 = scmp.lt.s32.totalorder %s742, 7
        %s746 = scalar_select %p745, %s742, 7
        %s747 = smul.addr %s744, 8
        %s748 = sadd.s32 %s746, %s747
        %s749 = smul.addr %s748, 8
        %s750 = scalar_lea.vmem %s3, %s749
        %s751 = smul.u32 8, %s28
        %v752 = vld [vmem:[%s686] sm:$0xff]
        %v753 = vld [vmem:[%s686 + $0x8] sm:$0x1]
        %v754 = vld [vmem:[%s686 + $0x10] sm:$0xff]
        %v755 = vld [vmem:[%s686 + $0x18] sm:$0x1]
        %v756 = vld [vmem:[%s686 + $0x20] sm:$0xff]
        %v757 = vld [vmem:[%s686 + $0x28] sm:$0x1]
        %v758 = vld [vmem:[%s686 + $0x30] sm:$0xff]
        %v759 = vld [vmem:[%s686 + $0x38] sm:$0x1]
        %v760 = vld [vmem:[%s686 + $0x40] sm:$0xff]
        %v761 = vld [vmem:[%s686 + $0x48] sm:$0x1]
        %v762 = vld [vmem:[%s686 + $0x50] sm:$0xff]
        %v763 = vld [vmem:[%s686 + $0x58] sm:$0x1]
        %v764 = vld [vmem:[%s686 + $0x60] sm:$0xff]
        %v765 = vld [vmem:[%s686 + $0x68] sm:$0x1]
        %v766 = vld [vmem:[%s686 + $0x70] sm:$0xff]
        %v767 = vld [vmem:[%s686 + $0x78] sm:$0x1]
        %v768 = vld [vmem:[%s686 + $0x80] sm:$0xff]
        %v769 = vld [vmem:[%s686 + $0x88] sm:$0x1]
        %v770 = vld [vmem:[%s686 + $0x90] sm:$0xff]
        %v771 = vld [vmem:[%s686 + $0x98] sm:$0x1]
        %v772 = vld [vmem:[%s686 + $0xa0] sm:$0xff]
        %v773 = vld [vmem:[%s686 + $0xa8] sm:$0x1]
        %v774 = vld [vmem:[%s686 + $0xb0] sm:$0xff]
        %v775 = vld [vmem:[%s686 + $0xb8] sm:$0x1]
        %v776 = vld [vmem:[%s686 + $0xc0] sm:$0xff]
        %v777 = vld [vmem:[%s686 + $0xc8] sm:$0x1]
        %v778 = vld [vmem:[%s686 + $0xd0] sm:$0xff]
        %v779 = vld [vmem:[%s686 + $0xd8] sm:$0x1]
        %v780 = vld [vmem:[%s686 + $0xe0] sm:$0xff]
        %v781 = vld [vmem:[%s686 + $0xe8] sm:$0x1]
        %v782 = vld [vmem:[%s686 + $0xf0] sm:$0xff]
        %v783 = vld [vmem:[%s686 + $0xf8] sm:$0x1]
        %v784 = vld [vmem:[%s686 + $0x100] sm:$0xff]
        %v785 = vld [vmem:[%s686 + $0x108] sm:$0x1]
        %v786 = vld [vmem:[%s686 + $0x110] sm:$0xff]
        %v787 = vld [vmem:[%s686 + $0x118] sm:$0x1]
        %v788 = vld [vmem:[%s686 + $0x120] sm:$0xff]
        %v789 = vld [vmem:[%s686 + $0x128] sm:$0x1]
        %v790 = vld [vmem:[%s686 + $0x130] sm:$0xff]
        %v791 = vld [vmem:[%s686 + $0x138] sm:$0x1]
        %v792 = vld [vmem:[%s686 + $0x140] sm:$0xff]
        %v793 = vld [vmem:[%s686 + $0x148] sm:$0x1]
        %v794 = vld [vmem:[%s686 + $0x150] sm:$0xff]
        %v795 = vld [vmem:[%s686 + $0x158] sm:$0x1]
        %v796 = vld [vmem:[%s686 + $0x160] sm:$0xff]
        %v797 = vld [vmem:[%s686 + $0x168] sm:$0x1]
        %v798 = vld [vmem:[%s686 + $0x170] sm:$0xff]
        %v799 = vld [vmem:[%s686 + $0x178] sm:$0x1]
        %v800 = vld [vmem:[%s686 + $0x180] sm:$0xff]
        %v801 = vld [vmem:[%s686 + $0x188] sm:$0x1]
        %v802 = vld [vmem:[%s686 + $0x190] sm:$0xff]
        %v803 = vld [vmem:[%s686 + $0x198] sm:$0x1]
        %v804 = vld [vmem:[%s686 + $0x1a0] sm:$0xff]
        %v805 = vld [vmem:[%s686 + $0x1a8] sm:$0x1]
        %v806 = vld [vmem:[%s686 + $0x1b0] sm:$0xff]
        %v807 = vld [vmem:[%s686 + $0x1b8] sm:$0x1]
        %v808 = vld [vmem:[%s686 + $0x1c0] sm:$0xff]
        %v809 = vld [vmem:[%s686 + $0x1c8] sm:$0x1]
        %v810 = vld [vmem:[%s686 + $0x1d0] sm:$0xff]
        %v811 = vld [vmem:[%s686 + $0x1d8] sm:$0x1]
        %v812 = vld [vmem:[%s686 + $0x1e0] sm:$0xff]
        %v813 = vld [vmem:[%s686 + $0x1e8] sm:$0x1]
        %v814 = vld [vmem:[%s686 + $0x1f0] sm:$0xff]
        %v815 = vld [vmem:[%s686 + $0x1f8] sm:$0x1]
        %v816 = vld [vmem:[%s693] sm:$0xff]
        %v817 = vld [vmem:[%s693 + $0x8] sm:$0x1]
        %v818 = vld [vmem:[%s693 + $0x10] sm:$0xff]
        %v819 = vld [vmem:[%s693 + $0x18] sm:$0x1]
        %v820 = vld [vmem:[%s693 + $0x20] sm:$0xff]
        %v821 = vld [vmem:[%s693 + $0x28] sm:$0x1]
        %v822 = vld [vmem:[%s693 + $0x30] sm:$0xff]
        %v823 = vld [vmem:[%s693 + $0x38] sm:$0x1]
        %v824 = vld [vmem:[%s2] sm:$0xff]
        %v825 = vld [vmem:[%s2 + $0x8] sm:$0xff]
        %v826 = vld [vmem:[%s2 + $0x10] sm:$0xff]
        %v827 = vld [vmem:[%s2 + $0x18] sm:$0xff]
        %v828 = vld [vmem:[%s2 + $0x20] sm:$0xf]
        %837 = vrot.lane.b32.xlu0 %v768, 4
        %v838 = vpop.permute.xlu0 %837
        %839 = vrot.lane.b32.xlu0 %v770, 4
        %v840 = vpop.permute.xlu0 %839
        %841 = vrot.lane.b32.xlu0 %v772, 4
        %v842 = vpop.permute.xlu0 %841
        %843 = vrot.lane.b32.xlu0 %v774, 4
        %v844 = vpop.permute.xlu0 %843
        %845 = vrot.lane.b32.xlu0 %v776, 4
        %v846 = vpop.permute.xlu0 %845
        %847 = vrot.lane.b32.xlu0 %v778, 4
        %v848 = vpop.permute.xlu0 %847
        %849 = vrot.lane.b32.xlu0 %v780, 4
        %v850 = vpop.permute.xlu0 %849
        %851 = vrot.lane.b32.xlu0 %v782, 4
        %v852 = vpop.permute.xlu0 %851
        %vm877 = vcmask 1046528
        %v878 = vrot.slane %v752, 1
        %v879 = vrot.slane %v753, 1
        %v880 = vsel %vm877, %v878, %v879
        %v881 = vrot.slane %v754, 1
        %v882 = vrot.slane %v755, 1
        %v883 = vsel %vm877, %v881, %v882
        %v884 = vrot.slane %v756, 1
        %v885 = vrot.slane %v757, 1
        %v886 = vsel %vm877, %v884, %v885
        %v887 = vrot.slane %v758, 1
        %v888 = vrot.slane %v759, 1
        %v889 = vsel %vm877, %v887, %v888
        %v890 = vrot.slane %v760, 1
        %v891 = vrot.slane %v761, 1
        %v892 = vsel %vm877, %v890, %v891
        %v893 = vrot.slane %v762, 1
        %v894 = vrot.slane %v763, 1
        %v895 = vsel %vm877, %v893, %v894
        %v896 = vrot.slane %v764, 1
        %v897 = vrot.slane %v765, 1
        %v898 = vsel %vm877, %v896, %v897
        %v899 = vrot.slane %v766, 1
        %v900 = vrot.slane %v767, 1
        %v901 = vsel %vm877, %v899, %v900
        %902 = vrot.lane.b32.xlu0 %v880, 8
        %v903 = vpop.permute.xlu0 %902
        %904 = vrot.lane.b32.xlu0 %v883, 8
        %v905 = vpop.permute.xlu0 %904
        %906 = vrot.lane.b32.xlu0 %v886, 8
        %v907 = vpop.permute.xlu0 %906
        %908 = vrot.lane.b32.xlu0 %v889, 8
        %v909 = vpop.permute.xlu0 %908
        %910 = vrot.lane.b32.xlu0 %v892, 8
        %v911 = vpop.permute.xlu0 %910
        %912 = vrot.lane.b32.xlu0 %v895, 8
        %v913 = vpop.permute.xlu0 %912
        %914 = vrot.lane.b32.xlu0 %v898, 8
        %v915 = vpop.permute.xlu0 %914
        %916 = vrot.lane.b32.xlu0 %v901, 8
        %v917 = vpop.permute.xlu0 %916
        %934 = vrot.lane.b32.xlu0 %v784, 12
        %v935 = vpop.permute.xlu0 %934
        %936 = vrot.lane.b32.xlu0 %v786, 12
        %v937 = vpop.permute.xlu0 %936
        %938 = vrot.lane.b32.xlu0 %v788, 12
        %v939 = vpop.permute.xlu0 %938
        %940 = vrot.lane.b32.xlu0 %v790, 12
        %v941 = vpop.permute.xlu0 %940
        %942 = vrot.lane.b32.xlu0 %v792, 12
        %v943 = vpop.permute.xlu0 %942
        %944 = vrot.lane.b32.xlu0 %v794, 12
        %v945 = vpop.permute.xlu0 %944
        %946 = vrot.lane.b32.xlu0 %v796, 12
        %v947 = vpop.permute.xlu0 %946
        %948 = vrot.lane.b32.xlu0 %v798, 12
        %v949 = vpop.permute.xlu0 %948
        %966 = vrot.lane.b32.xlu0 %v800, 16
        %v967 = vpop.permute.xlu0 %966
        %968 = vrot.lane.b32.xlu0 %v802, 16
        %v969 = vpop.permute.xlu0 %968
        %970 = vrot.lane.b32.xlu0 %v804, 16
        %v971 = vpop.permute.xlu0 %970
        %972 = vrot.lane.b32.xlu0 %v806, 16
        %v973 = vpop.permute.xlu0 %972
        %974 = vrot.lane.b32.xlu0 %v808, 16
        %v975 = vpop.permute.xlu0 %974
        %976 = vrot.lane.b32.xlu0 %v810, 16
        %v977 = vpop.permute.xlu0 %976
        %978 = vrot.lane.b32.xlu0 %v812, 16
        %v979 = vpop.permute.xlu0 %978
        %980 = vrot.lane.b32.xlu0 %v814, 16
        %v981 = vpop.permute.xlu0 %980
        %v998 = vrot.slane %v784, 1
        %v999 = vrot.slane %v785, 1
        %v1000 = vsel %vm877, %v998, %v999
        %v1001 = vrot.slane %v786, 1
        %v1002 = vrot.slane %v787, 1
        %v1003 = vsel %vm877, %v1001, %v1002
        %v1004 = vrot.slane %v788, 1
        %v1005 = vrot.slane %v789, 1
        %v1006 = vsel %vm877, %v1004, %v1005
        %v1007 = vrot.slane %v790, 1
        %v1008 = vrot.slane %v791, 1
        %v1009 = vsel %vm877, %v1007, %v1008
        %v1010 = vrot.slane %v792, 1
        %v1011 = vrot.slane %v793, 1
        %v1012 = vsel %vm877, %v1010, %v1011
        %v1013 = vrot.slane %v794, 1
        %v1014 = vrot.slane %v795, 1
        %v1015 = vsel %vm877, %v1013, %v1014
        %v1016 = vrot.slane %v796, 1
        %v1017 = vrot.slane %v797, 1
        %v1018 = vsel %vm877, %v1016, %v1017
        %v1019 = vrot.slane %v798, 1
        %v1020 = vrot.slane %v799, 1
        %v1021 = vsel %vm877, %v1019, %v1020
        %1022 = vrot.lane.b32.xlu0 %v1000, 20
        %v1023 = vpop.permute.xlu0 %1022
        %1024 = vrot.lane.b32.xlu0 %v1003, 20
        %v1025 = vpop.permute.xlu0 %1024
        %1026 = vrot.lane.b32.xlu0 %v1006, 20
        %v1027 = vpop.permute.xlu0 %1026
        %1028 = vrot.lane.b32.xlu0 %v1009, 20
        %v1029 = vpop.permute.xlu0 %1028
        %1030 = vrot.lane.b32.xlu0 %v1012, 20
        %v1031 = vpop.permute.xlu0 %1030
        %1032 = vrot.lane.b32.xlu0 %v1015, 20
        %v1033 = vpop.permute.xlu0 %1032
        %1034 = vrot.lane.b32.xlu0 %v1018, 20
        %v1035 = vpop.permute.xlu0 %1034
        %1036 = vrot.lane.b32.xlu0 %v1021, 20
        %v1037 = vpop.permute.xlu0 %1036
        %1047 = vrot.lane.b32.xlu0 %v754, 24
        %v1048 = vpop.permute.xlu0 %1047
        %1049 = vrot.lane.b32.xlu0 %v756, 24
        %v1050 = vpop.permute.xlu0 %1049
        %1051 = vrot.lane.b32.xlu0 %v758, 24
        %v1052 = vpop.permute.xlu0 %1051
        %1053 = vrot.lane.b32.xlu0 %v760, 24
        %v1054 = vpop.permute.xlu0 %1053
        %1055 = vrot.lane.b32.xlu0 %v762, 24
        %v1056 = vpop.permute.xlu0 %1055
        %1057 = vrot.lane.b32.xlu0 %v764, 24
        %v1058 = vpop.permute.xlu0 %1057
        %1059 = vrot.lane.b32.xlu0 %v766, 24
        %v1060 = vpop.permute.xlu0 %1059
        %1061 = vrot.lane.b32.xlu0 %v816, 24
        %v1062 = vpop.permute.xlu0 %1061
        %1072 = vrot.lane.b32.xlu0 %v770, 28
        %v1073 = vpop.permute.xlu0 %1072
        %1074 = vrot.lane.b32.xlu0 %v772, 28
        %v1075 = vpop.permute.xlu0 %1074
        %1076 = vrot.lane.b32.xlu0 %v774, 28
        %v1077 = vpop.permute.xlu0 %1076
        %1078 = vrot.lane.b32.xlu0 %v776, 28
        %v1079 = vpop.permute.xlu0 %1078
        %1080 = vrot.lane.b32.xlu0 %v778, 28
        %v1081 = vpop.permute.xlu0 %1080
        %1082 = vrot.lane.b32.xlu0 %v780, 28
        %v1083 = vpop.permute.xlu0 %1082
        %1084 = vrot.lane.b32.xlu0 %v782, 28
        %v1085 = vpop.permute.xlu0 %1084
        %1086 = vrot.lane.b32.xlu0 %v818, 28
        %v1087 = vpop.permute.xlu0 %1086
        %v1097 = vrot.slane %v816, 1
        %v1098 = vrot.slane %v817, 1
        %v1099 = vsel %vm877, %v1097, %v1098
        %1100 = vrot.lane.b32.xlu0 %v883, 32
        %v1101 = vpop.permute.xlu0 %1100
        %1102 = vrot.lane.b32.xlu0 %v886, 32
        %v1103 = vpop.permute.xlu0 %1102
        %1104 = vrot.lane.b32.xlu0 %v889, 32
        %v1105 = vpop.permute.xlu0 %1104
        %1106 = vrot.lane.b32.xlu0 %v892, 32
        %v1107 = vpop.permute.xlu0 %1106
        %1108 = vrot.lane.b32.xlu0 %v895, 32
        %v1109 = vpop.permute.xlu0 %1108
        %1110 = vrot.lane.b32.xlu0 %v898, 32
        %v1111 = vpop.permute.xlu0 %1110
        %1112 = vrot.lane.b32.xlu0 %v901, 32
        %v1113 = vpop.permute.xlu0 %1112
        %1114 = vrot.lane.b32.xlu0 %v1099, 32
        %v1115 = vpop.permute.xlu0 %1114
        %vm1124 = vcmask 31744
        %v1125 = vsel %vm1124, %v752, %v838
        %v1126 = vsel %vm1124, %v754, %v840
        %v1127 = vsel %vm1124, %v756, %v842
        %v1128 = vsel %vm1124, %v758, %v844
        %v1129 = vsel %vm1124, %v760, %v846
        %v1130 = vsel %vm1124, %v762, %v848
        %v1131 = vsel %vm1124, %v764, %v850
        %v1132 = vsel %vm1124, %v766, %v852
        %vm1133 = vcmask 64512
        %v1134 = vsel %vm1133, %v1125, %v903
        %v1135 = vsel %vm1133, %v1126, %v905
        %v1136 = vsel %vm1133, %v1127, %v907
        %v1137 = vsel %vm1133, %v1128, %v909
        %v1138 = vsel %vm1133, %v1129, %v911
        %v1139 = vsel %vm1133, %v1130, %v913
        %v1140 = vsel %vm1133, %v1131, %v915
        %v1141 = vsel %vm1133, %v1132, %v917
        %vm1142 = vcmask 97280
        %v1143 = vsel %vm1142, %v1134, %v935
        %v1144 = vsel %vm1142, %v1135, %v937
        %v1145 = vsel %vm1142, %v1136, %v939
        %v1146 = vsel %vm1142, %v1137, %v941
        %v1147 = vsel %vm1142, %v1138, %v943
        %v1148 = vsel %vm1142, %v1139, %v945
        %v1149 = vsel %vm1142, %v1140, %v947
        %v1150 = vsel %vm1142, %v1141, %v949
        %vm1151 = vcmask 130048
        %v1152 = vsel %vm1151, %v1143, %v967
        %v1153 = vsel %vm1151, %v1144, %v969
        %v1154 = vsel %vm1151, %v1145, %v971
        %v1155 = vsel %vm1151, %v1146, %v973
        %v1156 = vsel %vm1151, %v1147, %v975
        %v1157 = vsel %vm1151, %v1148, %v977
        %v1158 = vsel %vm1151, %v1149, %v979
        %v1159 = vsel %vm1151, %v1150, %v981
        %vm1160 = vcmask 162816
        %v1161 = vsel %vm1160, %v1152, %v1023
        %v1162 = vsel %vm1160, %v1153, %v1025
        %v1163 = vsel %vm1160, %v1154, %v1027
        %v1164 = vsel %vm1160, %v1155, %v1029
        %v1165 = vsel %vm1160, %v1156, %v1031
        %v1166 = vsel %vm1160, %v1157, %v1033
        %v1167 = vsel %vm1160, %v1158, %v1035
        %v1168 = vsel %vm1160, %v1159, %v1037
        %vm1169 = vcmask 195584
        %v1170 = vsel %vm1169, %v1161, %v1048
        %v1171 = vsel %vm1169, %v1162, %v1050
        %v1172 = vsel %vm1169, %v1163, %v1052
        %v1173 = vsel %vm1169, %v1164, %v1054
        %v1174 = vsel %vm1169, %v1165, %v1056
        %v1175 = vsel %vm1169, %v1166, %v1058
        %v1176 = vsel %vm1169, %v1167, %v1060
        %v1177 = vsel %vm1169, %v1168, %v1062
        %vm1178 = vcmask 228352
        %v1179 = vsel %vm1178, %v1170, %v1073
        %v1180 = vsel %vm1178, %v1171, %v1075
        %v1181 = vsel %vm1178, %v1172, %v1077
        %v1182 = vsel %vm1178, %v1173, %v1079
        %v1183 = vsel %vm1178, %v1174, %v1081
        %v1184 = vsel %vm1178, %v1175, %v1083
        %v1185 = vsel %vm1178, %v1176, %v1085
        %v1186 = vsel %vm1178, %v1177, %v1087
        %vm1187 = vcmask 261120
        %v1188 = vsel %vm1187, %v1179, %v1101
        %v1189 = vsel %vm1187, %v1180, %v1103
        %v1190 = vsel %vm1187, %v1181, %v1105
        %v1191 = vsel %vm1187, %v1182, %v1107
        %v1192 = vsel %vm1187, %v1183, %v1109
        %v1193 = vsel %vm1187, %v1184, %v1111
        %v1194 = vsel %vm1187, %v1185, %v1113
        %v1195 = vsel %vm1187, %v1186, %v1115
        %vm1196 = vcmask 293888
        %v1198 = vsel %vm1196, %v1188, 0
        %v1201 = vsel %vm1196, %v1189, 0
        %v1204 = vsel %vm1196, %v1190, 0
        %v1207 = vsel %vm1196, %v1191, 0
        %v1210 = vsel %vm1196, %v1192, 0
        %v1213 = vsel %vm1196, %v1193, 0
        %v1216 = vsel %vm1196, %v1194, 0
        %v1219 = vsel %vm1196, %v1195, 0
        %vm1221 = vcmask 1043456
        %v1223 = vsel %vm1221, %v828, 0
        %1225 = vmatprep.subr.mxu0 0.0
        %1226 = vmatpush1.msra.mxu0 %v824
        %1227 = vmatprep.subr.mxu0 0.0
        %1228 = vmatpush1.msra.mxu0 %v825
        %1229 = vmatprep.subr.mxu0 0.0
        %1230 = vmatpush1.msra.mxu0 %v826
        %1231 = vmatprep.subr.mxu0 0.0
        %1232 = vmatpush1.msra.mxu0 %v827
        %1233 = vmatprep.subr.mxu0 0.0
        %1234 = vmatpush1.msra.mxu0 %v1223
        %1235 = vmatprep.subr.mxu0 0.0
        %1236 = vmatpush1.msra.mxu0 0.0
        %1237 = vmatprep.subr.mxu0 0.0
        %1238 = vmatpush1.msra.mxu0 0.0
        %1239 = vmatprep.subr.mxu0 0.0
        %1240 = vmatpush1.msra.mxu0 0.0
        %1241 = vmatprep.subr.mxu0 0.0
        %1242 = vmatpush1.msra.mxu0 0.0
        %1243 = vmatprep.subr.mxu0 0.0
        %1244 = vmatpush1.msra.mxu0 0.0
        %1245 = vmatprep.subr.mxu0 0.0
        %1246 = vmatpush1.msra.mxu0 0.0
        %1247 = vmatprep.subr.mxu0 0.0
        %1248 = vmatpush1.msra.mxu0 0.0
        %1249 = vmatprep.subr.mxu0 0.0
        %1250 = vmatpush1.msra.mxu0 0.0
        %1251 = vmatprep.subr.mxu0 0.0
        %1252 = vmatpush1.msra.mxu0 0.0
        %1253 = vmatprep.subr.mxu0 0.0
        %1254 = vmatpush1.msra.mxu0 0.0
        %1255 = vmatprep.subr.mxu0 0.0
        %1256 = vmatpush1.msra.mxu0 0.0
        %1257 = vmatprep.subr.mxu0 0.0
        %1258 = vmatpush1.msra.mxu0 0.0
        %1259 = vmatprep.subr.mxu0 0.0
        %1260 = vmatpush1.msra.mxu0 0.0
        %1261 = vmatprep.subr.mxu0 0.0
        %1262 = vmatpush1.msra.mxu0 0.0
        %1263 = vmatprep.subr.mxu0 0.0
        %1264 = vmatpush1.msra.mxu0 0.0
        %1265 = vmatprep.subr.mxu0 0.0
        %1266 = vmatpush1.msra.mxu0 0.0
        %1267 = vmatprep.subr.mxu0 0.0
        %1268 = vmatpush1.msra.mxu0 0.0
        %1269 = vmatprep.subr.mxu0 0.0
        %1270 = vmatpush1.msra.mxu0 0.0
        %1271 = vmatprep.subr.mxu0 0.0
        %1272 = vmatpush1.msra.mxu0 0.0
        %1273 = vmatprep.subr.mxu0 0.0
        %1274 = vmatpush1.msra.mxu0 0.0
        %1275 = vmatprep.subr.mxu0 0.0
        %1276 = vmatpush1.msra.mxu0 0.0
        %1277 = vmatprep.subr.mxu0 0.0
        %1278 = vmatpush1.msra.mxu0 0.0
        %1279 = vmatprep.subr.mxu0 0.0
        %1280 = vmatpush1.msra.mxu0 0.0
        %1281 = vmatprep.subr.mxu0 0.0
        %1282 = vmatpush1.msra.mxu0 0.0
        %1283 = vmatprep.subr.mxu0 0.0
        %1284 = vmatpush1.msra.mxu0 0.0
        %1285 = vmatprep.subr.mxu0 0.0
        %1286 = vmatpush1.msra.mxu0 0.0
        %1287 = vmatprep.subr.mxu0 0.0
        %1288 = vmatpush1.msra.mxu0 0.0
        %1289 = vmatprep.mubr.f32.mxu0 0.0
        %1290 = vmatmul.mubr.f32.gmra.mrb[0].mxu0 %v1198
        %v1291 = vpop.f32.mrb[0].mxu0
        %v1292 = vadd.f32 0.0, %v1291
        %v1293 = vpop.f32.mrb[0].mxu0
        %1294 = vmatprep.mubr.f32.mxu0 0.0
        %1295 = vmatmul.mubr.f32.gmra.mrb[0].mxu0 %v1201
        %v1296 = vpop.f32.mrb[0].mxu0
        %v1297 = vadd.f32 0.0, %v1296
        %v1298 = vpop.f32.mrb[0].mxu0
        %1299 = vmatprep.mubr.f32.mxu0 0.0
        %1300 = vmatmul.mubr.f32.gmra.mrb[0].mxu0 %v1204
        %v1301 = vpop.f32.mrb[0].mxu0
        %v1302 = vadd.f32 0.0, %v1301
        %v1303 = vpop.f32.mrb[0].mxu0
        %1304 = vmatprep.mubr.f32.mxu0 0.0
        %1305 = vmatmul.mubr.f32.gmra.mrb[0].mxu0 %v1207
        %v1306 = vpop.f32.mrb[0].mxu0
        %v1307 = vadd.f32 0.0, %v1306
        %v1308 = vpop.f32.mrb[0].mxu0
        %1309 = vmatprep.mubr.f32.mxu0 0.0
        %1310 = vmatmul.mubr.f32.gmra.mrb[0].mxu0 %v1210
        %v1311 = vpop.f32.mrb[0].mxu0
        %v1312 = vadd.f32 0.0, %v1311
        %v1313 = vpop.f32.mrb[0].mxu0
        %1314 = vmatprep.mubr.f32.mxu0 0.0
        %1315 = vmatmul.mubr.f32.gmra.mrb[0].mxu0 %v1213
        %v1316 = vpop.f32.mrb[0].mxu0
        %v1317 = vadd.f32 0.0, %v1316
        %v1318 = vpop.f32.mrb[0].mxu0
        %1319 = vmatprep.mubr.f32.mxu0 0.0
        %1320 = vmatmul.mubr.f32.gmra.mrb[0].mxu0 %v1216
        %v1321 = vpop.f32.mrb[0].mxu0
        %v1322 = vadd.f32 0.0, %v1321
        %v1323 = vpop.f32.mrb[0].mxu0
        %1324 = vmatprep.mubr.f32.mxu0 0.0
        %1325 = vmatmul.mubr.f32.gmra.mrb[0].mxu0 %v1219
        %v1326 = vpop.f32.mrb[0].mxu0
        %v1327 = vadd.f32 0.0, %v1326
        %v1328 = vpop.f32.mrb[0].mxu0
        %1329 = vdwg.mxu0
        %1330 = vrot.lane.b32.xlu0 %v880, 4
        %v1331 = vpop.permute.xlu0 %1330
        %1332 = vrot.lane.b32.xlu0 %v883, 4
        %v1333 = vpop.permute.xlu0 %1332
        %1334 = vrot.lane.b32.xlu0 %v886, 4
        %v1335 = vpop.permute.xlu0 %1334
        %1336 = vrot.lane.b32.xlu0 %v889, 4
        %v1337 = vpop.permute.xlu0 %1336
        %1338 = vrot.lane.b32.xlu0 %v892, 4
        %v1339 = vpop.permute.xlu0 %1338
        %1340 = vrot.lane.b32.xlu0 %v895, 4
        %v1341 = vpop.permute.xlu0 %1340
        %1342 = vrot.lane.b32.xlu0 %v898, 4
        %v1343 = vpop.permute.xlu0 %1342
        %1344 = vrot.lane.b32.xlu0 %v901, 4
        %v1345 = vpop.permute.xlu0 %1344
        %v1362 = vrot.slane %v768, 1
        %v1363 = vrot.slane %v769, 1
        %v1364 = vsel %vm877, %v1362, %v1363
        %v1365 = vrot.slane %v770, 1
        %v1366 = vrot.slane %v771, 1
        %v1367 = vsel %vm877, %v1365, %v1366
        %v1368 = vrot.slane %v772, 1
        %v1369 = vrot.slane %v773, 1
        %v1370 = vsel %vm877, %v1368, %v1369
        %v1371 = vrot.slane %v774, 1
        %v1372 = vrot.slane %v775, 1
        %v1373 = vsel %vm877, %v1371, %v1372
        %v1374 = vrot.slane %v776, 1
        %v1375 = vrot.slane %v777, 1
        %v1376 = vsel %vm877, %v1374, %v1375
        %v1377 = vrot.slane %v778, 1
        %v1378 = vrot.slane %v779, 1
        %v1379 = vsel %vm877, %v1377, %v1378
        %v1380 = vrot.slane %v780, 1
        %v1381 = vrot.slane %v781, 1
        %v1382 = vsel %vm877, %v1380, %v1381
        %v1383 = vrot.slane %v782, 1
        %v1384 = vrot.slane %v783, 1
        %v1385 = vsel %vm877, %v1383, %v1384
        %1386 = vrot.lane.b32.xlu0 %v1364, 8
        %v1387 = vpop.permute.xlu0 %1386
        %1388 = vrot.lane.b32.xlu0 %v1367, 8
        %v1389 = vpop.permute.xlu0 %1388
        %1390 = vrot.lane.b32.xlu0 %v1370, 8
        %v1391 = vpop.permute.xlu0 %1390
        %1392 = vrot.lane.b32.xlu0 %v1373, 8
        %v1393 = vpop.permute.xlu0 %1392
        %1394 = vrot.lane.b32.xlu0 %v1376, 8
        %v1395 = vpop.permute.xlu0 %1394
        %1396 = vrot.lane.b32.xlu0 %v1379, 8
        %v1397 = vpop.permute.xlu0 %1396
        %1398 = vrot.lane.b32.xlu0 %v1382, 8
        %v1399 = vpop.permute.xlu0 %1398
        %1400 = vrot.lane.b32.xlu0 %v1385, 8
        %v1401 = vpop.permute.xlu0 %1400
        %1410 = vrot.lane.b32.xlu0 %v800, 12
        %v1411 = vpop.permute.xlu0 %1410
        %1412 = vrot.lane.b32.xlu0 %v802, 12
        %v1413 = vpop.permute.xlu0 %1412
        %1414 = vrot.lane.b32.xlu0 %v804, 12
        %v1415 = vpop.permute.xlu0 %1414
        %1416 = vrot.lane.b32.xlu0 %v806, 12
        %v1417 = vpop.permute.xlu0 %1416
        %1418 = vrot.lane.b32.xlu0 %v808, 12
        %v1419 = vpop.permute.xlu0 %1418
        %1420 = vrot.lane.b32.xlu0 %v810, 12
        %v1421 = vpop.permute.xlu0 %1420
        %1422 = vrot.lane.b32.xlu0 %v812, 12
        %v1423 = vpop.permute.xlu0 %1422
        %1424 = vrot.lane.b32.xlu0 %v814, 12
        %v1425 = vpop.permute.xlu0 %1424
        %1434 = vrot.lane.b32.xlu0 %v1000, 16
        %v1435 = vpop.permute.xlu0 %1434
        %1436 = vrot.lane.b32.xlu0 %v1003, 16
        %v1437 = vpop.permute.xlu0 %1436
        %1438 = vrot.lane.b32.xlu0 %v1006, 16
        %v1439 = vpop.permute.xlu0 %1438
        %1440 = vrot.lane.b32.xlu0 %v1009, 16
        %v1441 = vpop.permute.xlu0 %1440
        %1442 = vrot.lane.b32.xlu0 %v1012, 16
        %v1443 = vpop.permute.xlu0 %1442
        %1444 = vrot.lane.b32.xlu0 %v1015, 16
        %v1445 = vpop.permute.xlu0 %1444
        %1446 = vrot.lane.b32.xlu0 %v1018, 16
        %v1447 = vpop.permute.xlu0 %1446
        %1448 = vrot.lane.b32.xlu0 %v1021, 16
        %v1449 = vpop.permute.xlu0 %1448
        %v1466 = vrot.slane %v800, 1
        %v1467 = vrot.slane %v801, 1
        %v1468 = vsel %vm877, %v1466, %v1467
        %v1469 = vrot.slane %v802, 1
        %v1470 = vrot.slane %v803, 1
        %v1471 = vsel %vm877, %v1469, %v1470
        %v1472 = vrot.slane %v804, 1
        %v1473 = vrot.slane %v805, 1
        %v1474 = vsel %vm877, %v1472, %v1473
        %v1475 = vrot.slane %v806, 1
        %v1476 = vrot.slane %v807, 1
        %v1477 = vsel %vm877, %v1475, %v1476
        %v1478 = vrot.slane %v808, 1
        %v1479 = vrot.slane %v809, 1
        %v1480 = vsel %vm877, %v1478, %v1479
        %v1481 = vrot.slane %v810, 1
        %v1482 = vrot.slane %v811, 1
        %v1483 = vsel %vm877, %v1481, %v1482
        %v1484 = vrot.slane %v812, 1
        %v1485 = vrot.slane %v813, 1
        %v1486 = vsel %vm877, %v1484, %v1485
        %v1487 = vrot.slane %v814, 1
        %v1488 = vrot.slane %v815, 1
        %v1489 = vsel %vm877, %v1487, %v1488
        %1490 = vrot.lane.b32.xlu0 %v1468, 20
        %v1491 = vpop.permute.xlu0 %1490
        %1492 = vrot.lane.b32.xlu0 %v1471, 20
        %v1493 = vpop.permute.xlu0 %1492
        %1494 = vrot.lane.b32.xlu0 %v1474, 20
        %v1495 = vpop.permute.xlu0 %1494
        %1496 = vrot.lane.b32.xlu0 %v1477, 20
        %v1497 = vpop.permute.xlu0 %1496
        %1498 = vrot.lane.b32.xlu0 %v1480, 20
        %v1499 = vpop.permute.xlu0 %1498
        %1500 = vrot.lane.b32.xlu0 %v1483, 20
        %v1501 = vpop.permute.xlu0 %1500
        %1502 = vrot.lane.b32.xlu0 %v1486, 20
        %v1503 = vpop.permute.xlu0 %1502
        %1504 = vrot.lane.b32.xlu0 %v1489, 20
        %v1505 = vpop.permute.xlu0 %1504
        %1514 = vrot.lane.b32.xlu0 %v770, 24
        %v1515 = vpop.permute.xlu0 %1514
        %1516 = vrot.lane.b32.xlu0 %v772, 24
        %v1517 = vpop.permute.xlu0 %1516
        %1518 = vrot.lane.b32.xlu0 %v774, 24
        %v1519 = vpop.permute.xlu0 %1518
        %1520 = vrot.lane.b32.xlu0 %v776, 24
        %v1521 = vpop.permute.xlu0 %1520
        %1522 = vrot.lane.b32.xlu0 %v778, 24
        %v1523 = vpop.permute.xlu0 %1522
        %1524 = vrot.lane.b32.xlu0 %v780, 24
        %v1525 = vpop.permute.xlu0 %1524
        %1526 = vrot.lane.b32.xlu0 %v782, 24
        %v1527 = vpop.permute.xlu0 %1526
        %1528 = vrot.lane.b32.xlu0 %v818, 24
        %v1529 = vpop.permute.xlu0 %1528
        %1538 = vrot.lane.b32.xlu0 %v883, 28
        %v1539 = vpop.permute.xlu0 %1538
        %1540 = vrot.lane.b32.xlu0 %v886, 28
        %v1541 = vpop.permute.xlu0 %1540
        %1542 = vrot.lane.b32.xlu0 %v889, 28
        %v1543 = vpop.permute.xlu0 %1542
        %1544 = vrot.lane.b32.xlu0 %v892, 28
        %v1545 = vpop.permute.xlu0 %1544
        %1546 = vrot.lane.b32.xlu0 %v895, 28
        %v1547 = vpop.permute.xlu0 %1546
        %1548 = vrot.lane.b32.xlu0 %v898, 28
        %v1549 = vpop.permute.xlu0 %1548
        %1550 = vrot.lane.b32.xlu0 %v901, 28
        %v1551 = vpop.permute.xlu0 %1550
        %1552 = vrot.lane.b32.xlu0 %v1099, 28
        %v1553 = vpop.permute.xlu0 %1552
        %v1563 = vrot.slane %v818, 1
        %v1564 = vrot.slane %v819, 1
        %v1565 = vsel %vm877, %v1563, %v1564
        %1566 = vrot.lane.b32.xlu0 %v1367, 32
        %v1567 = vpop.permute.xlu0 %1566
        %1568 = vrot.lane.b32.xlu0 %v1370, 32
        %v1569 = vpop.permute.xlu0 %1568
        %1570 = vrot.lane.b32.xlu0 %v1373, 32
        %v1571 = vpop.permute.xlu0 %1570
        %1572 = vrot.lane.b32.xlu0 %v1376, 32
        %v1573 = vpop.permute.xlu0 %1572
        %1574 = vrot.lane.b32.xlu0 %v1379, 32
        %v1575 = vpop.permute.xlu0 %1574
        %1576 = vrot.lane.b32.xlu0 %v1382, 32
        %v1577 = vpop.permute.xlu0 %1576
        %1578 = vrot.lane.b32.xlu0 %v1385, 32
        %v1579 = vpop.permute.xlu0 %1578
        %1580 = vrot.lane.b32.xlu0 %v1565, 32
        %v1581 = vpop.permute.xlu0 %1580
        %v1590 = vsel %vm1124, %v768, %v1331
        %v1591 = vsel %vm1124, %v770, %v1333
        %v1592 = vsel %vm1124, %v772, %v1335
        %v1593 = vsel %vm1124, %v774, %v1337
        %v1594 = vsel %vm1124, %v776, %v1339
        %v1595 = vsel %vm1124, %v778, %v1341
        %v1596 = vsel %vm1124, %v780, %v1343
        %v1597 = vsel %vm1124, %v782, %v1345
        %v1598 = vsel %vm1133, %v1590, %v1387
        %v1599 = vsel %vm1133, %v1591, %v1389
        %v1600 = vsel %vm1133, %v1592, %v1391
        %v1601 = vsel %vm1133, %v1593, %v1393
        %v1602 = vsel %vm1133, %v1594, %v1395
        %v1603 = vsel %vm1133, %v1595, %v1397
        %v1604 = vsel %vm1133, %v1596, %v1399
        %v1605 = vsel %vm1133, %v1597, %v1401
        %v1606 = vsel %vm1142, %v1598, %v1411
        %v1607 = vsel %vm1142, %v1599, %v1413
        %v1608 = vsel %vm1142, %v1600, %v1415
        %v1609 = vsel %vm1142, %v1601, %v1417
        %v1610 = vsel %vm1142, %v1602, %v1419
        %v1611 = vsel %vm1142, %v1603, %v1421
        %v1612 = vsel %vm1142, %v1604, %v1423
        %v1613 = vsel %vm1142, %v1605, %v1425
        %v1614 = vsel %vm1151, %v1606, %v1435
        %v1615 = vsel %vm1151, %v1607, %v1437
        %v1616 = vsel %vm1151, %v1608, %v1439
        %v1617 = vsel %vm1151, %v1609, %v1441
        %v1618 = vsel %vm1151, %v1610, %v1443
        %v1619 = vsel %vm1151, %v1611, %v1445
        %v1620 = vsel %vm1151, %v1612, %v1447
        %v1621 = vsel %vm1151, %v1613, %v1449
        %v1622 = vsel %vm1160, %v1614, %v1491
        %v1623 = vsel %vm1160, %v1615, %v1493
        %v1624 = vsel %vm1160, %v1616, %v1495
        %v1625 = vsel %vm1160, %v1617, %v1497
        %v1626 = vsel %vm1160, %v1618, %v1499
        %v1627 = vsel %vm1160, %v1619, %v1501
        %v1628 = vsel %vm1160, %v1620, %v1503
        %v1629 = vsel %vm1160, %v1621, %v1505
        %v1630 = vsel %vm1169, %v1622, %v1515
        %v1631 = vsel %vm1169, %v1623, %v1517
        %v1632 = vsel %vm1169, %v1624, %v1519
        %v1633 = vsel %vm1169, %v1625, %v1521
        %v1634 = vsel %vm1169, %v1626, %v1523
        %v1635 = vsel %vm1169, %v1627, %v1525
        %v1636 = vsel %vm1169, %v1628, %v1527
        %v1637 = vsel %vm1169, %v1629, %v1529
        %v1638 = vsel %vm1178, %v1630, %v1539
        %v1639 = vsel %vm1178, %v1631, %v1541
        %v1640 = vsel %vm1178, %v1632, %v1543
        %v1641 = vsel %vm1178, %v1633, %v1545
        %v1642 = vsel %vm1178, %v1634, %v1547
        %v1643 = vsel %vm1178, %v1635, %v1549
        %v1644 = vsel %vm1178, %v1636, %v1551
        %v1645 = vsel %vm1178, %v1637, %v1553
        %v1646 = vsel %vm1187, %v1638, %v1567
        %v1647 = vsel %vm1187, %v1639, %v1569
        %v1648 = vsel %vm1187, %v1640, %v1571
        %v1649 = vsel %vm1187, %v1641, %v1573
        %v1650 = vsel %vm1187, %v1642, %v1575
        %v1651 = vsel %vm1187, %v1643, %v1577
        %v1652 = vsel %vm1187, %v1644, %v1579
        %v1653 = vsel %vm1187, %v1645, %v1581
        %v1655 = vsel %vm1196, %v1646, 0
        %v1658 = vsel %vm1196, %v1647, 0
        %v1661 = vsel %vm1196, %v1648, 0
        %v1664 = vsel %vm1196, %v1649, 0
        %v1667 = vsel %vm1196, %v1650, 0
        %v1670 = vsel %vm1196, %v1651, 0
        %v1673 = vsel %vm1196, %v1652, 0
        %v1676 = vsel %vm1196, %v1653, 0
        %1678 = vmatprep.subr.mxu0 0.0
        %1679 = vmatpush1.msra.mxu0 %v824
        %1680 = vmatprep.subr.mxu0 0.0
        %1681 = vmatpush1.msra.mxu0 %v825
        %1682 = vmatprep.subr.mxu0 0.0
        %1683 = vmatpush1.msra.mxu0 %v826
        %1684 = vmatprep.subr.mxu0 0.0
        %1685 = vmatpush1.msra.mxu0 %v827
        %1686 = vmatprep.subr.mxu0 0.0
        %1687 = vmatpush1.msra.mxu0 %v1223
        %1688 = vmatprep.subr.mxu0 0.0
        %1689 = vmatpush1.msra.mxu0 0.0
        %1690 = vmatprep.subr.mxu0 0.0
        %1691 = vmatpush1.msra.mxu0 0.0
        %1692 = vmatprep.subr.mxu0 0.0
        %1693 = vmatpush1.msra.mxu0 0.0
        %1694 = vmatprep.subr.mxu0 0.0
        %1695 = vmatpush1.msra.mxu0 0.0
        %1696 = vmatprep.subr.mxu0 0.0
        %1697 = vmatpush1.msra.mxu0 0.0
        %1698 = vmatprep.subr.mxu0 0.0
        %1699 = vmatpush1.msra.mxu0 0.0
        %1700 = vmatprep.subr.mxu0 0.0
        %1701 = vmatpush1.msra.mxu0 0.0
        %1702 = vmatprep.subr.mxu0 0.0
        %1703 = vmatpush1.msra.mxu0 0.0
        %1704 = vmatprep.subr.mxu0 0.0
        %1705 = vmatpush1.msra.mxu0 0.0
        %1706 = vmatprep.subr.mxu0 0.0
        %1707 = vmatpush1.msra.mxu0 0.0
        %1708 = vmatprep.subr.mxu0 0.0
        %1709 = vmatpush1.msra.mxu0 0.0
        %1710 = vmatprep.subr.mxu0 0.0
        %1711 = vmatpush1.msra.mxu0 0.0
        %1712 = vmatprep.subr.mxu0 0.0
        %1713 = vmatpush1.msra.mxu0 0.0
        %1714 = vmatprep.subr.mxu0 0.0
        %1715 = vmatpush1.msra.mxu0 0.0
        %1716 = vmatprep.subr.mxu0 0.0
        %1717 = vmatpush1.msra.mxu0 0.0
        %1718 = vmatprep.subr.mxu0 0.0
        %1719 = vmatpush1.msra.mxu0 0.0
        %1720 = vmatprep.subr.mxu0 0.0
        %1721 = vmatpush1.msra.mxu0 0.0
        %1722 = vmatprep.subr.mxu0 0.0
        %1723 = vmatpush1.msra.mxu0 0.0
        %1724 = vmatprep.subr.mxu0 0.0
        %1725 = vmatpush1.msra.mxu0 0.0
        %1726 = vmatprep.subr.mxu0 0.0
        %1727 = vmatpush1.msra.mxu0 0.0
        %1728 = vmatprep.subr.mxu0 0.0
        %1729 = vmatpush1.msra.mxu0 0.0
        %1730 = vmatprep.subr.mxu0 0.0
        %1731 = vmatpush1.msra.mxu0 0.0
        %1732 = vmatprep.subr.mxu0 0.0
        %1733 = vmatpush1.msra.mxu0 0.0
        %1734 = vmatprep.subr.mxu0 0.0
        %1735 = vmatpush1.msra.mxu0 0.0
        %1736 = vmatprep.subr.mxu0 0.0
        %1737 = vmatpush1.msra.mxu0 0.0
        %1738 = vmatprep.subr.mxu0 0.0
        %1739 = vmatpush1.msra.mxu0 0.0
        %1740 = vmatprep.subr.mxu0 0.0
        %1741 = vmatpush1.msra.mxu0 0.0
        %1742 = vmatprep.mubr.f32.mxu0 0.0
        %1743 = vmatmul.mubr.f32.gmra.mrb[0].mxu0 %v1655
        %v1744 = vpop.f32.mrb[0].mxu0
        %v1745 = vadd.f32 0.0, %v1744
        %v1746 = vpop.f32.mrb[0].mxu0
        %1747 = vmatprep.mubr.f32.mxu0 0.0
        %1748 = vmatmul.mubr.f32.gmra.mrb[0].mxu0 %v1658
        %v1749 = vpop.f32.mrb[0].mxu0
        %v1750 = vadd.f32 0.0, %v1749
        %v1751 = vpop.f32.mrb[0].mxu0
        %1752 = vmatprep.mubr.f32.mxu0 0.0
        %1753 = vmatmul.mubr.f32.gmra.mrb[0].mxu0 %v1661
        %v1754 = vpop.f32.mrb[0].mxu0
        %v1755 = vadd.f32 0.0, %v1754
        %v1756 = vpop.f32.mrb[0].mxu0
        %1757 = vmatprep.mubr.f32.mxu0 0.0
        %1758 = vmatmul.mubr.f32.gmra.mrb[0].mxu0 %v1664
        %v1759 = vpop.f32.mrb[0].mxu0
        %v1760 = vadd.f32 0.0, %v1759
        %v1761 = vpop.f32.mrb[0].mxu0
        %1762 = vmatprep.mubr.f32.mxu0 0.0
        %1763 = vmatmul.mubr.f32.gmra.mrb[0].mxu0 %v1667
        %v1764 = vpop.f32.mrb[0].mxu0
        %v1765 = vadd.f32 0.0, %v1764
        %v1766 = vpop.f32.mrb[0].mxu0
        %1767 = vmatprep.mubr.f32.mxu0 0.0
        %1768 = vmatmul.mubr.f32.gmra.mrb[0].mxu0 %v1670
        %v1769 = vpop.f32.mrb[0].mxu0
        %v1770 = vadd.f32 0.0, %v1769
        %v1771 = vpop.f32.mrb[0].mxu0
        %1772 = vmatprep.mubr.f32.mxu0 0.0
        %1773 = vmatmul.mubr.f32.gmra.mrb[0].mxu0 %v1673
        %v1774 = vpop.f32.mrb[0].mxu0
        %v1775 = vadd.f32 0.0, %v1774
        %v1776 = vpop.f32.mrb[0].mxu0
        %1777 = vmatprep.mubr.f32.mxu0 0.0
        %1778 = vmatmul.mubr.f32.gmra.mrb[0].mxu0 %v1676
        %v1779 = vpop.f32.mrb[0].mxu0
        %v1780 = vadd.f32 0.0, %v1779
        %v1781 = vpop.f32.mrb[0].mxu0
        %1782 = vdwg.mxu0
        %v1783 = vmax.f32 %v1292, %v1745
        %v1784 = vmax.f32 %v1297, %v1750
        %v1785 = vmax.f32 %v1302, %v1755
        %v1786 = vmax.f32 %v1307, %v1760
        %v1787 = vmax.f32 %v1312, %v1765
        %v1788 = vmax.f32 %v1317, %v1770
        %v1789 = vmax.f32 %v1322, %v1775
        %v1790 = vmax.f32 %v1327, %v1780
        %1791 = vrot.lane.b32.xlu0 %v800, 4
        %v1792 = vpop.permute.xlu0 %1791
        %1793 = vrot.lane.b32.xlu0 %v802, 4
        %v1794 = vpop.permute.xlu0 %1793
        %1795 = vrot.lane.b32.xlu0 %v804, 4
        %v1796 = vpop.permute.xlu0 %1795
        %1797 = vrot.lane.b32.xlu0 %v806, 4
        %v1798 = vpop.permute.xlu0 %1797
        %1799 = vrot.lane.b32.xlu0 %v808, 4
        %v1800 = vpop.permute.xlu0 %1799
        %1801 = vrot.lane.b32.xlu0 %v810, 4
        %v1802 = vpop.permute.xlu0 %1801
        %1803 = vrot.lane.b32.xlu0 %v812, 4
        %v1804 = vpop.permute.xlu0 %1803
        %1805 = vrot.lane.b32.xlu0 %v814, 4
        %v1806 = vpop.permute.xlu0 %1805
        %1815 = vrot.lane.b32.xlu0 %v1000, 8
        %v1816 = vpop.permute.xlu0 %1815
        %1817 = vrot.lane.b32.xlu0 %v1003, 8
        %v1818 = vpop.permute.xlu0 %1817
        %1819 = vrot.lane.b32.xlu0 %v1006, 8
        %v1820 = vpop.permute.xlu0 %1819
        %1821 = vrot.lane.b32.xlu0 %v1009, 8
        %v1822 = vpop.permute.xlu0 %1821
        %1823 = vrot.lane.b32.xlu0 %v1012, 8
        %v1824 = vpop.permute.xlu0 %1823
        %1825 = vrot.lane.b32.xlu0 %v1015, 8
        %v1826 = vpop.permute.xlu0 %1825
        %1827 = vrot.lane.b32.xlu0 %v1018, 8
        %v1828 = vpop.permute.xlu0 %1827
        %1829 = vrot.lane.b32.xlu0 %v1021, 8
        %v1830 = vpop.permute.xlu0 %1829
        %1839 = vrot.lane.b32.xlu0 %v754, 12
        %v1840 = vpop.permute.xlu0 %1839
        %1841 = vrot.lane.b32.xlu0 %v756, 12
        %v1842 = vpop.permute.xlu0 %1841
        %1843 = vrot.lane.b32.xlu0 %v758, 12
        %v1844 = vpop.permute.xlu0 %1843
        %1845 = vrot.lane.b32.xlu0 %v760, 12
        %v1846 = vpop.permute.xlu0 %1845
        %1847 = vrot.lane.b32.xlu0 %v762, 12
        %v1848 = vpop.permute.xlu0 %1847
        %1849 = vrot.lane.b32.xlu0 %v764, 12
        %v1850 = vpop.permute.xlu0 %1849
        %1851 = vrot.lane.b32.xlu0 %v766, 12
        %v1852 = vpop.permute.xlu0 %1851
        %1853 = vrot.lane.b32.xlu0 %v816, 12
        %v1854 = vpop.permute.xlu0 %1853
        %1863 = vrot.lane.b32.xlu0 %v770, 16
        %v1864 = vpop.permute.xlu0 %1863
        %1865 = vrot.lane.b32.xlu0 %v772, 16
        %v1866 = vpop.permute.xlu0 %1865
        %1867 = vrot.lane.b32.xlu0 %v774, 16
        %v1868 = vpop.permute.xlu0 %1867
        %1869 = vrot.lane.b32.xlu0 %v776, 16
        %v1870 = vpop.permute.xlu0 %1869
        %1871 = vrot.lane.b32.xlu0 %v778, 16
        %v1872 = vpop.permute.xlu0 %1871
        %1873 = vrot.lane.b32.xlu0 %v780, 16
        %v1874 = vpop.permute.xlu0 %1873
        %1875 = vrot.lane.b32.xlu0 %v782, 16
        %v1876 = vpop.permute.xlu0 %1875
        %1877 = vrot.lane.b32.xlu0 %v818, 16
        %v1878 = vpop.permute.xlu0 %1877
        %1887 = vrot.lane.b32.xlu0 %v883, 20
        %v1888 = vpop.permute.xlu0 %1887
        %1889 = vrot.lane.b32.xlu0 %v886, 20
        %v1890 = vpop.permute.xlu0 %1889
        %1891 = vrot.lane.b32.xlu0 %v889, 20
        %v1892 = vpop.permute.xlu0 %1891
        %1893 = vrot.lane.b32.xlu0 %v892, 20
        %v1894 = vpop.permute.xlu0 %1893
        %1895 = vrot.lane.b32.xlu0 %v895, 20
        %v1896 = vpop.permute.xlu0 %1895
        %1897 = vrot.lane.b32.xlu0 %v898, 20
        %v1898 = vpop.permute.xlu0 %1897
        %1899 = vrot.lane.b32.xlu0 %v901, 20
        %v1900 = vpop.permute.xlu0 %1899
        %1901 = vrot.lane.b32.xlu0 %v1099, 20
        %v1902 = vpop.permute.xlu0 %1901
        %1912 = vrot.lane.b32.xlu0 %v786, 24
        %v1913 = vpop.permute.xlu0 %1912
        %1914 = vrot.lane.b32.xlu0 %v788, 24
        %v1915 = vpop.permute.xlu0 %1914
        %1916 = vrot.lane.b32.xlu0 %v790, 24
        %v1917 = vpop.permute.xlu0 %1916
        %1918 = vrot.lane.b32.xlu0 %v792, 24
        %v1919 = vpop.permute.xlu0 %1918
        %1920 = vrot.lane.b32.xlu0 %v794, 24
        %v1921 = vpop.permute.xlu0 %1920
        %1922 = vrot.lane.b32.xlu0 %v796, 24
        %v1923 = vpop.permute.xlu0 %1922
        %1924 = vrot.lane.b32.xlu0 %v798, 24
        %v1925 = vpop.permute.xlu0 %1924
        %1926 = vrot.lane.b32.xlu0 %v820, 24
        %v1927 = vpop.permute.xlu0 %1926
        %1937 = vrot.lane.b32.xlu0 %v802, 28
        %v1938 = vpop.permute.xlu0 %1937
        %1939 = vrot.lane.b32.xlu0 %v804, 28
        %v1940 = vpop.permute.xlu0 %1939
        %1941 = vrot.lane.b32.xlu0 %v806, 28
        %v1942 = vpop.permute.xlu0 %1941
        %1943 = vrot.lane.b32.xlu0 %v808, 28
        %v1944 = vpop.permute.xlu0 %1943
        %1945 = vrot.lane.b32.xlu0 %v810, 28
        %v1946 = vpop.permute.xlu0 %1945
        %1947 = vrot.lane.b32.xlu0 %v812, 28
        %v1948 = vpop.permute.xlu0 %1947
        %1949 = vrot.lane.b32.xlu0 %v814, 28
        %v1950 = vpop.permute.xlu0 %1949
        %1951 = vrot.lane.b32.xlu0 %v822, 28
        %v1952 = vpop.permute.xlu0 %1951
        %v1962 = vrot.slane %v820, 1
        %v1963 = vrot.slane %v821, 1
        %v1964 = vsel %vm877, %v1962, %v1963
        %1965 = vrot.lane.b32.xlu0 %v1003, 32
        %v1966 = vpop.permute.xlu0 %1965
        %1967 = vrot.lane.b32.xlu0 %v1006, 32
        %v1968 = vpop.permute.xlu0 %1967
        %1969 = vrot.lane.b32.xlu0 %v1009, 32
        %v1970 = vpop.permute.xlu0 %1969
        %1971 = vrot.lane.b32.xlu0 %v1012, 32
        %v1972 = vpop.permute.xlu0 %1971
        %1973 = vrot.lane.b32.xlu0 %v1015, 32
        %v1974 = vpop.permute.xlu0 %1973
        %1975 = vrot.lane.b32.xlu0 %v1018, 32
        %v1976 = vpop.permute.xlu0 %1975
        %1977 = vrot.lane.b32.xlu0 %v1021, 32
        %v1978 = vpop.permute.xlu0 %1977
        %1979 = vrot.lane.b32.xlu0 %v1964, 32
        %v1980 = vpop.permute.xlu0 %1979
        %v1989 = vsel %vm1124, %v784, %v1792
        %v1990 = vsel %vm1124, %v786, %v1794
        %v1991 = vsel %vm1124, %v788, %v1796
        %v1992 = vsel %vm1124, %v790, %v1798
        %v1993 = vsel %vm1124, %v792, %v1800
        %v1994 = vsel %vm1124, %v794, %v1802
        %v1995 = vsel %vm1124, %v796, %v1804
        %v1996 = vsel %vm1124, %v798, %v1806
        %v1997 = vsel %vm1133, %v1989, %v1816
        %v1998 = vsel %vm1133, %v1990, %v1818
        %v1999 = vsel %vm1133, %v1991, %v1820
        %v2000 = vsel %vm1133, %v1992, %v1822
        %v2001 = vsel %vm1133, %v1993, %v1824
        %v2002 = vsel %vm1133, %v1994, %v1826
        %v2003 = vsel %vm1133, %v1995, %v1828
        %v2004 = vsel %vm1133, %v1996, %v1830
        %v2005 = vsel %vm1142, %v1997, %v1840
        %v2006 = vsel %vm1142, %v1998, %v1842
        %v2007 = vsel %vm1142, %v1999, %v1844
        %v2008 = vsel %vm1142, %v2000, %v1846
        %v2009 = vsel %vm1142, %v2001, %v1848
        %v2010 = vsel %vm1142, %v2002, %v1850
        %v2011 = vsel %vm1142, %v2003, %v1852
        %v2012 = vsel %vm1142, %v2004, %v1854
        %v2013 = vsel %vm1151, %v2005, %v1864
        %v2014 = vsel %vm1151, %v2006, %v1866
        %v2015 = vsel %vm1151, %v2007, %v1868
        %v2016 = vsel %vm1151, %v2008, %v1870
        %v2017 = vsel %vm1151, %v2009, %v1872
        %v2018 = vsel %vm1151, %v2010, %v1874
        %v2019 = vsel %vm1151, %v2011, %v1876
        %v2020 = vsel %vm1151, %v2012, %v1878
        %v2021 = vsel %vm1160, %v2013, %v1888
        %v2022 = vsel %vm1160, %v2014, %v1890
        %v2023 = vsel %vm1160, %v2015, %v1892
        %v2024 = vsel %vm1160, %v2016, %v1894
        %v2025 = vsel %vm1160, %v2017, %v1896
        %v2026 = vsel %vm1160, %v2018, %v1898
        %v2027 = vsel %vm1160, %v2019, %v1900
        %v2028 = vsel %vm1160, %v2020, %v1902
        %v2029 = vsel %vm1169, %v2021, %v1913
        %v2030 = vsel %vm1169, %v2022, %v1915
        %v2031 = vsel %vm1169, %v2023, %v1917
        %v2032 = vsel %vm1169, %v2024, %v1919
        %v2033 = vsel %vm1169, %v2025, %v1921
        %v2034 = vsel %vm1169, %v2026, %v1923
        %v2035 = vsel %vm1169, %v2027, %v1925
        %v2036 = vsel %vm1169, %v2028, %v1927
        %v2037 = vsel %vm1178, %v2029, %v1938
        %v2038 = vsel %vm1178, %v2030, %v1940
        %v2039 = vsel %vm1178, %v2031, %v1942
        %v2040 = vsel %vm1178, %v2032, %v1944
        %v2041 = vsel %vm1178, %v2033, %v1946
        %v2042 = vsel %vm1178, %v2034, %v1948
        %v2043 = vsel %vm1178, %v2035, %v1950
        %v2044 = vsel %vm1178, %v2036, %v1952
        %v2045 = vsel %vm1187, %v2037, %v1966
        %v2046 = vsel %vm1187, %v2038, %v1968
        %v2047 = vsel %vm1187, %v2039, %v1970
        %v2048 = vsel %vm1187, %v2040, %v1972
        %v2049 = vsel %vm1187, %v2041, %v1974
        %v2050 = vsel %vm1187, %v2042, %v1976
        %v2051 = vsel %vm1187, %v2043, %v1978
        %v2052 = vsel %vm1187, %v2044, %v1980
        %v2054 = vsel %vm1196, %v2045, 0
        %v2057 = vsel %vm1196, %v2046, 0
        %v2060 = vsel %vm1196, %v2047, 0
        %v2063 = vsel %vm1196, %v2048, 0
        %v2066 = vsel %vm1196, %v2049, 0
        %v2069 = vsel %vm1196, %v2050, 0
        %v2072 = vsel %vm1196, %v2051, 0
        %v2075 = vsel %vm1196, %v2052, 0
        %2077 = vmatprep.subr.mxu0 0.0
        %2078 = vmatpush1.msra.mxu0 %v824
        %2079 = vmatprep.subr.mxu0 0.0
        %2080 = vmatpush1.msra.mxu0 %v825
        %2081 = vmatprep.subr.mxu0 0.0
        %2082 = vmatpush1.msra.mxu0 %v826
        %2083 = vmatprep.subr.mxu0 0.0
        %2084 = vmatpush1.msra.mxu0 %v827
        %2085 = vmatprep.subr.mxu0 0.0
        %2086 = vmatpush1.msra.mxu0 %v1223
        %2087 = vmatprep.subr.mxu0 0.0
        %2088 = vmatpush1.msra.mxu0 0.0
        %2089 = vmatprep.subr.mxu0 0.0
        %2090 = vmatpush1.msra.mxu0 0.0
        %2091 = vmatprep.subr.mxu0 0.0
        %2092 = vmatpush1.msra.mxu0 0.0
        %2093 = vmatprep.subr.mxu0 0.0
        %2094 = vmatpush1.msra.mxu0 0.0
        %2095 = vmatprep.subr.mxu0 0.0
        %2096 = vmatpush1.msra.mxu0 0.0
        %2097 = vmatprep.subr.mxu0 0.0
        %2098 = vmatpush1.msra.mxu0 0.0
        %2099 = vmatprep.subr.mxu0 0.0
        %2100 = vmatpush1.msra.mxu0 0.0
        %2101 = vmatprep.subr.mxu0 0.0
        %2102 = vmatpush1.msra.mxu0 0.0
        %2103 = vmatprep.subr.mxu0 0.0
        %2104 = vmatpush1.msra.mxu0 0.0
        %2105 = vmatprep.subr.mxu0 0.0
        %2106 = vmatpush1.msra.mxu0 0.0
        %2107 = vmatprep.subr.mxu0 0.0
        %2108 = vmatpush1.msra.mxu0 0.0
        %2109 = vmatprep.subr.mxu0 0.0
        %2110 = vmatpush1.msra.mxu0 0.0
        %2111 = vmatprep.subr.mxu0 0.0
        %2112 = vmatpush1.msra.mxu0 0.0
        %2113 = vmatprep.subr.mxu0 0.0
        %2114 = vmatpush1.msra.mxu0 0.0
        %2115 = vmatprep.subr.mxu0 0.0
        %2116 = vmatpush1.msra.mxu0 0.0
        %2117 = vmatprep.subr.mxu0 0.0
        %2118 = vmatpush1.msra.mxu0 0.0
        %2119 = vmatprep.subr.mxu0 0.0
        %2120 = vmatpush1.msra.mxu0 0.0
        %2121 = vmatprep.subr.mxu0 0.0
        %2122 = vmatpush1.msra.mxu0 0.0
        %2123 = vmatprep.subr.mxu0 0.0
        %2124 = vmatpush1.msra.mxu0 0.0
        %2125 = vmatprep.subr.mxu0 0.0
        %2126 = vmatpush1.msra.mxu0 0.0
        %2127 = vmatprep.subr.mxu0 0.0
        %2128 = vmatpush1.msra.mxu0 0.0
        %2129 = vmatprep.subr.mxu0 0.0
        %2130 = vmatpush1.msra.mxu0 0.0
        %2131 = vmatprep.subr.mxu0 0.0
        %2132 = vmatpush1.msra.mxu0 0.0
        %2133 = vmatprep.subr.mxu0 0.0
        %2134 = vmatpush1.msra.mxu0 0.0
        %2135 = vmatprep.subr.mxu0 0.0
        %2136 = vmatpush1.msra.mxu0 0.0
        %2137 = vmatprep.subr.mxu0 0.0
        %2138 = vmatpush1.msra.mxu0 0.0
        %2139 = vmatprep.subr.mxu0 0.0
        %2140 = vmatpush1.msra.mxu0 0.0
        %2141 = vmatprep.mubr.f32.mxu0 0.0
        %2142 = vmatmul.mubr.f32.gmra.mrb[0].mxu0 %v2054
        %v2143 = vpop.f32.mrb[0].mxu0
        %v2144 = vadd.f32 0.0, %v2143
        %v2145 = vpop.f32.mrb[0].mxu0
        %2146 = vmatprep.mubr.f32.mxu0 0.0
        %2147 = vmatmul.mubr.f32.gmra.mrb[0].mxu0 %v2057
        %v2148 = vpop.f32.mrb[0].mxu0
        %v2149 = vadd.f32 0.0, %v2148
        %v2150 = vpop.f32.mrb[0].mxu0
        %2151 = vmatprep.mubr.f32.mxu0 0.0
        %2152 = vmatmul.mubr.f32.gmra.mrb[0].mxu0 %v2060
        %v2153 = vpop.f32.mrb[0].mxu0
        %v2154 = vadd.f32 0.0, %v2153
        %v2155 = vpop.f32.mrb[0].mxu0
        %2156 = vmatprep.mubr.f32.mxu0 0.0
        %2157 = vmatmul.mubr.f32.gmra.mrb[0].mxu0 %v2063
        %v2158 = vpop.f32.mrb[0].mxu0
        %v2159 = vadd.f32 0.0, %v2158
        %v2160 = vpop.f32.mrb[0].mxu0
        %2161 = vmatprep.mubr.f32.mxu0 0.0
        %2162 = vmatmul.mubr.f32.gmra.mrb[0].mxu0 %v2066
        %v2163 = vpop.f32.mrb[0].mxu0
        %v2164 = vadd.f32 0.0, %v2163
        %v2165 = vpop.f32.mrb[0].mxu0
        %2166 = vmatprep.mubr.f32.mxu0 0.0
        %2167 = vmatmul.mubr.f32.gmra.mrb[0].mxu0 %v2069
        %v2168 = vpop.f32.mrb[0].mxu0
        %v2169 = vadd.f32 0.0, %v2168
        %v2170 = vpop.f32.mrb[0].mxu0
        %2171 = vmatprep.mubr.f32.mxu0 0.0
        %2172 = vmatmul.mubr.f32.gmra.mrb[0].mxu0 %v2072
        %v2173 = vpop.f32.mrb[0].mxu0
        %v2174 = vadd.f32 0.0, %v2173
        %v2175 = vpop.f32.mrb[0].mxu0
        %2176 = vmatprep.mubr.f32.mxu0 0.0
        %2177 = vmatmul.mubr.f32.gmra.mrb[0].mxu0 %v2075
        %v2178 = vpop.f32.mrb[0].mxu0
        %v2179 = vadd.f32 0.0, %v2178
        %v2180 = vpop.f32.mrb[0].mxu0
        %2181 = vdwg.mxu0
        %v2182 = vmax.f32 %v1783, %v2144
        %v2183 = vmax.f32 %v1784, %v2149
        %v2184 = vmax.f32 %v1785, %v2154
        %v2185 = vmax.f32 %v1786, %v2159
        %v2186 = vmax.f32 %v1787, %v2164
        %v2187 = vmax.f32 %v1788, %v2169
        %v2188 = vmax.f32 %v1789, %v2174
        %v2189 = vmax.f32 %v1790, %v2179
        %2190 = vrot.lane.b32.xlu0 %v1000, 4
        %v2191 = vpop.permute.xlu0 %2190
        %2192 = vrot.lane.b32.xlu0 %v1003, 4
        %v2193 = vpop.permute.xlu0 %2192
        %2194 = vrot.lane.b32.xlu0 %v1006, 4
        %v2195 = vpop.permute.xlu0 %2194
        %2196 = vrot.lane.b32.xlu0 %v1009, 4
        %v2197 = vpop.permute.xlu0 %2196
        %2198 = vrot.lane.b32.xlu0 %v1012, 4
        %v2199 = vpop.permute.xlu0 %2198
        %2200 = vrot.lane.b32.xlu0 %v1015, 4
        %v2201 = vpop.permute.xlu0 %2200
        %2202 = vrot.lane.b32.xlu0 %v1018, 4
        %v2203 = vpop.permute.xlu0 %2202
        %2204 = vrot.lane.b32.xlu0 %v1021, 4
        %v2205 = vpop.permute.xlu0 %2204
        %2214 = vrot.lane.b32.xlu0 %v1468, 8
        %v2215 = vpop.permute.xlu0 %2214
        %2216 = vrot.lane.b32.xlu0 %v1471, 8
        %v2217 = vpop.permute.xlu0 %2216
        %2218 = vrot.lane.b32.xlu0 %v1474, 8
        %v2219 = vpop.permute.xlu0 %2218
        %2220 = vrot.lane.b32.xlu0 %v1477, 8
        %v2221 = vpop.permute.xlu0 %2220
        %2222 = vrot.lane.b32.xlu0 %v1480, 8
        %v2223 = vpop.permute.xlu0 %2222
        %2224 = vrot.lane.b32.xlu0 %v1483, 8
        %v2225 = vpop.permute.xlu0 %2224
        %2226 = vrot.lane.b32.xlu0 %v1486, 8
        %v2227 = vpop.permute.xlu0 %2226
        %2228 = vrot.lane.b32.xlu0 %v1489, 8
        %v2229 = vpop.permute.xlu0 %2228
        %2238 = vrot.lane.b32.xlu0 %v770, 12
        %v2239 = vpop.permute.xlu0 %2238
        %2240 = vrot.lane.b32.xlu0 %v772, 12
        %v2241 = vpop.permute.xlu0 %2240
        %2242 = vrot.lane.b32.xlu0 %v774, 12
        %v2243 = vpop.permute.xlu0 %2242
        %2244 = vrot.lane.b32.xlu0 %v776, 12
        %v2245 = vpop.permute.xlu0 %2244
        %2246 = vrot.lane.b32.xlu0 %v778, 12
        %v2247 = vpop.permute.xlu0 %2246
        %2248 = vrot.lane.b32.xlu0 %v780, 12
        %v2249 = vpop.permute.xlu0 %2248
        %2250 = vrot.lane.b32.xlu0 %v782, 12
        %v2251 = vpop.permute.xlu0 %2250
        %2252 = vrot.lane.b32.xlu0 %v818, 12
        %v2253 = vpop.permute.xlu0 %2252
        %2262 = vrot.lane.b32.xlu0 %v883, 16
        %v2263 = vpop.permute.xlu0 %2262
        %2264 = vrot.lane.b32.xlu0 %v886, 16
        %v2265 = vpop.permute.xlu0 %2264
        %2266 = vrot.lane.b32.xlu0 %v889, 16
        %v2267 = vpop.permute.xlu0 %2266
        %2268 = vrot.lane.b32.xlu0 %v892, 16
        %v2269 = vpop.permute.xlu0 %2268
        %2270 = vrot.lane.b32.xlu0 %v895, 16
        %v2271 = vpop.permute.xlu0 %2270
        %2272 = vrot.lane.b32.xlu0 %v898, 16
        %v2273 = vpop.permute.xlu0 %2272
        %2274 = vrot.lane.b32.xlu0 %v901, 16
        %v2275 = vpop.permute.xlu0 %2274
        %2276 = vrot.lane.b32.xlu0 %v1099, 16
        %v2277 = vpop.permute.xlu0 %2276
        %2286 = vrot.lane.b32.xlu0 %v1367, 20
        %v2287 = vpop.permute.xlu0 %2286
        %2288 = vrot.lane.b32.xlu0 %v1370, 20
        %v2289 = vpop.permute.xlu0 %2288
        %2290 = vrot.lane.b32.xlu0 %v1373, 20
        %v2291 = vpop.permute.xlu0 %2290
        %2292 = vrot.lane.b32.xlu0 %v1376, 20
        %v2293 = vpop.permute.xlu0 %2292
        %2294 = vrot.lane.b32.xlu0 %v1379, 20
        %v2295 = vpop.permute.xlu0 %2294
        %2296 = vrot.lane.b32.xlu0 %v1382, 20
        %v2297 = vpop.permute.xlu0 %2296
        %2298 = vrot.lane.b32.xlu0 %v1385, 20
        %v2299 = vpop.permute.xlu0 %2298
        %2300 = vrot.lane.b32.xlu0 %v1565, 20
        %v2301 = vpop.permute.xlu0 %2300
        %2310 = vrot.lane.b32.xlu0 %v802, 24
        %v2311 = vpop.permute.xlu0 %2310
        %2312 = vrot.lane.b32.xlu0 %v804, 24
        %v2313 = vpop.permute.xlu0 %2312
        %2314 = vrot.lane.b32.xlu0 %v806, 24
        %v2315 = vpop.permute.xlu0 %2314
        %2316 = vrot.lane.b32.xlu0 %v808, 24
        %v2317 = vpop.permute.xlu0 %2316
        %2318 = vrot.lane.b32.xlu0 %v810, 24
        %v2319 = vpop.permute.xlu0 %2318
        %2320 = vrot.lane.b32.xlu0 %v812, 24
        %v2321 = vpop.permute.xlu0 %2320
        %2322 = vrot.lane.b32.xlu0 %v814, 24
        %v2323 = vpop.permute.xlu0 %2322
        %2324 = vrot.lane.b32.xlu0 %v822, 24
        %v2325 = vpop.permute.xlu0 %2324
        %2334 = vrot.lane.b32.xlu0 %v1003, 28
        %v2335 = vpop.permute.xlu0 %2334
        %2336 = vrot.lane.b32.xlu0 %v1006, 28
        %v2337 = vpop.permute.xlu0 %2336
        %2338 = vrot.lane.b32.xlu0 %v1009, 28
        %v2339 = vpop.permute.xlu0 %2338
        %2340 = vrot.lane.b32.xlu0 %v1012, 28
        %v2341 = vpop.permute.xlu0 %2340
        %2342 = vrot.lane.b32.xlu0 %v1015, 28
        %v2343 = vpop.permute.xlu0 %2342
        %2344 = vrot.lane.b32.xlu0 %v1018, 28
        %v2345 = vpop.permute.xlu0 %2344
        %2346 = vrot.lane.b32.xlu0 %v1021, 28
        %v2347 = vpop.permute.xlu0 %2346
        %2348 = vrot.lane.b32.xlu0 %v1964, 28
        %v2349 = vpop.permute.xlu0 %2348
        %v2359 = vrot.slane %v822, 1
        %v2360 = vrot.slane %v823, 1
        %v2361 = vsel %vm877, %v2359, %v2360
        %2362 = vrot.lane.b32.xlu0 %v1471, 32
        %v2363 = vpop.permute.xlu0 %2362
        %2364 = vrot.lane.b32.xlu0 %v1474, 32
        %v2365 = vpop.permute.xlu0 %2364
        %2366 = vrot.lane.b32.xlu0 %v1477, 32
        %v2367 = vpop.permute.xlu0 %2366
        %2368 = vrot.lane.b32.xlu0 %v1480, 32
        %v2369 = vpop.permute.xlu0 %2368
        %2370 = vrot.lane.b32.xlu0 %v1483, 32
        %v2371 = vpop.permute.xlu0 %2370
        %2372 = vrot.lane.b32.xlu0 %v1486, 32
        %v2373 = vpop.permute.xlu0 %2372
        %2374 = vrot.lane.b32.xlu0 %v1489, 32
        %v2375 = vpop.permute.xlu0 %2374
        %2376 = vrot.lane.b32.xlu0 %v2361, 32
        %v2377 = vpop.permute.xlu0 %2376
        %v2386 = vsel %vm1124, %v800, %v2191
        %v2387 = vsel %vm1124, %v802, %v2193
        %v2388 = vsel %vm1124, %v804, %v2195
        %v2389 = vsel %vm1124, %v806, %v2197
        %v2390 = vsel %vm1124, %v808, %v2199
        %v2391 = vsel %vm1124, %v810, %v2201
        %v2392 = vsel %vm1124, %v812, %v2203
        %v2393 = vsel %vm1124, %v814, %v2205
        %v2394 = vsel %vm1133, %v2386, %v2215
        %v2395 = vsel %vm1133, %v2387, %v2217
        %v2396 = vsel %vm1133, %v2388, %v2219
        %v2397 = vsel %vm1133, %v2389, %v2221
        %v2398 = vsel %vm1133, %v2390, %v2223
        %v2399 = vsel %vm1133, %v2391, %v2225
        %v2400 = vsel %vm1133, %v2392, %v2227
        %v2401 = vsel %vm1133, %v2393, %v2229
        %v2402 = vsel %vm1142, %v2394, %v2239
        %v2403 = vsel %vm1142, %v2395, %v2241
        %v2404 = vsel %vm1142, %v2396, %v2243
        %v2405 = vsel %vm1142, %v2397, %v2245
        %v2406 = vsel %vm1142, %v2398, %v2247
        %v2407 = vsel %vm1142, %v2399, %v2249
        %v2408 = vsel %vm1142, %v2400, %v2251
        %v2409 = vsel %vm1142, %v2401, %v2253
        %v2410 = vsel %vm1151, %v2402, %v2263
        %v2411 = vsel %vm1151, %v2403, %v2265
        %v2412 = vsel %vm1151, %v2404, %v2267
        %v2413 = vsel %vm1151, %v2405, %v2269
        %v2414 = vsel %vm1151, %v2406, %v2271
        %v2415 = vsel %vm1151, %v2407, %v2273
        %v2416 = vsel %vm1151, %v2408, %v2275
        %v2417 = vsel %vm1151, %v2409, %v2277
        %v2418 = vsel %vm1160, %v2410, %v2287
        %v2419 = vsel %vm1160, %v2411, %v2289
        %v2420 = vsel %vm1160, %v2412, %v2291
        %v2421 = vsel %vm1160, %v2413, %v2293
        %v2422 = vsel %vm1160, %v2414, %v2295
        %v2423 = vsel %vm1160, %v2415, %v2297
        %v2424 = vsel %vm1160, %v2416, %v2299
        %v2425 = vsel %vm1160, %v2417, %v2301
        %v2426 = vsel %vm1169, %v2418, %v2311
        %v2427 = vsel %vm1169, %v2419, %v2313
        %v2428 = vsel %vm1169, %v2420, %v2315
        %v2429 = vsel %vm1169, %v2421, %v2317
        %v2430 = vsel %vm1169, %v2422, %v2319
        %v2431 = vsel %vm1169, %v2423, %v2321
        %v2432 = vsel %vm1169, %v2424, %v2323
        %v2433 = vsel %vm1169, %v2425, %v2325
        %v2434 = vsel %vm1178, %v2426, %v2335
        %v2435 = vsel %vm1178, %v2427, %v2337
        %v2436 = vsel %vm1178, %v2428, %v2339
        %v2437 = vsel %vm1178, %v2429, %v2341
        %v2438 = vsel %vm1178, %v2430, %v2343
        %v2439 = vsel %vm1178, %v2431, %v2345
        %v2440 = vsel %vm1178, %v2432, %v2347
        %v2441 = vsel %vm1178, %v2433, %v2349
        %v2442 = vsel %vm1187, %v2434, %v2363
        %v2443 = vsel %vm1187, %v2435, %v2365
        %v2444 = vsel %vm1187, %v2436, %v2367
        %v2445 = vsel %vm1187, %v2437, %v2369
        %v2446 = vsel %vm1187, %v2438, %v2371
        %v2447 = vsel %vm1187, %v2439, %v2373
        %v2448 = vsel %vm1187, %v2440, %v2375
        %v2449 = vsel %vm1187, %v2441, %v2377
        %v2451 = vsel %vm1196, %v2442, 0
        %v2454 = vsel %vm1196, %v2443, 0
        %v2457 = vsel %vm1196, %v2444, 0
        %v2460 = vsel %vm1196, %v2445, 0
        %v2463 = vsel %vm1196, %v2446, 0
        %v2466 = vsel %vm1196, %v2447, 0
        %v2469 = vsel %vm1196, %v2448, 0
        %v2472 = vsel %vm1196, %v2449, 0
        %2474 = vmatprep.subr.mxu0 0.0
        %2475 = vmatpush1.msra.mxu0 %v824
        %2476 = vmatprep.subr.mxu0 0.0
        %2477 = vmatpush1.msra.mxu0 %v825
        %2478 = vmatprep.subr.mxu0 0.0
        %2479 = vmatpush1.msra.mxu0 %v826
        %2480 = vmatprep.subr.mxu0 0.0
        %2481 = vmatpush1.msra.mxu0 %v827
        %2482 = vmatprep.subr.mxu0 0.0
        %2483 = vmatpush1.msra.mxu0 %v1223
        %2484 = vmatprep.subr.mxu0 0.0
        %2485 = vmatpush1.msra.mxu0 0.0
        %2486 = vmatprep.subr.mxu0 0.0
        %2487 = vmatpush1.msra.mxu0 0.0
        %2488 = vmatprep.subr.mxu0 0.0
        %2489 = vmatpush1.msra.mxu0 0.0
        %2490 = vmatprep.subr.mxu0 0.0
        %2491 = vmatpush1.msra.mxu0 0.0
        %2492 = vmatprep.subr.mxu0 0.0
        %2493 = vmatpush1.msra.mxu0 0.0
        %2494 = vmatprep.subr.mxu0 0.0
        %2495 = vmatpush1.msra.mxu0 0.0
        %2496 = vmatprep.subr.mxu0 0.0
        %2497 = vmatpush1.msra.mxu0 0.0
        %2498 = vmatprep.subr.mxu0 0.0
        %2499 = vmatpush1.msra.mxu0 0.0
        %2500 = vmatprep.subr.mxu0 0.0
        %2501 = vmatpush1.msra.mxu0 0.0
        %2502 = vmatprep.subr.mxu0 0.0
        %2503 = vmatpush1.msra.mxu0 0.0
        %2504 = vmatprep.subr.mxu0 0.0
        %2505 = vmatpush1.msra.mxu0 0.0
        %2506 = vmatprep.subr.mxu0 0.0
        %2507 = vmatpush1.msra.mxu0 0.0
        %2508 = vmatprep.subr.mxu0 0.0
        %2509 = vmatpush1.msra.mxu0 0.0
        %2510 = vmatprep.subr.mxu0 0.0
        %2511 = vmatpush1.msra.mxu0 0.0
        %2512 = vmatprep.subr.mxu0 0.0
        %2513 = vmatpush1.msra.mxu0 0.0
        %2514 = vmatprep.subr.mxu0 0.0
        %2515 = vmatpush1.msra.mxu0 0.0
        %2516 = vmatprep.subr.mxu0 0.0
        %2517 = vmatpush1.msra.mxu0 0.0
        %2518 = vmatprep.subr.mxu0 0.0
        %2519 = vmatpush1.msra.mxu0 0.0
        %2520 = vmatprep.subr.mxu0 0.0
        %2521 = vmatpush1.msra.mxu0 0.0
        %2522 = vmatprep.subr.mxu0 0.0
        %2523 = vmatpush1.msra.mxu0 0.0
        %2524 = vmatprep.subr.mxu0 0.0
        %2525 = vmatpush1.msra.mxu0 0.0
        %2526 = vmatprep.subr.mxu0 0.0
        %2527 = vmatpush1.msra.mxu0 0.0
        %2528 = vmatprep.subr.mxu0 0.0
        %2529 = vmatpush1.msra.mxu0 0.0
        %2530 = vmatprep.subr.mxu0 0.0
        %2531 = vmatpush1.msra.mxu0 0.0
        %2532 = vmatprep.subr.mxu0 0.0
        %2533 = vmatpush1.msra.mxu0 0.0
        %2534 = vmatprep.subr.mxu0 0.0
        %2535 = vmatpush1.msra.mxu0 0.0
        %2536 = vmatprep.subr.mxu0 0.0
        %2537 = vmatpush1.msra.mxu0 0.0
        %2538 = vmatprep.mubr.f32.mxu0 0.0
        %2539 = vmatmul.mubr.f32.gmra.mrb[0].mxu0 %v2451
        %v2540 = vpop.f32.mrb[0].mxu0
        %v2541 = vadd.f32 0.0, %v2540
        %v2542 = vpop.f32.mrb[0].mxu0
        %2543 = vmatprep.mubr.f32.mxu0 0.0
        %2544 = vmatmul.mubr.f32.gmra.mrb[0].mxu0 %v2454
        %v2545 = vpop.f32.mrb[0].mxu0
        %v2546 = vadd.f32 0.0, %v2545
        %v2547 = vpop.f32.mrb[0].mxu0
        %2548 = vmatprep.mubr.f32.mxu0 0.0
        %2549 = vmatmul.mubr.f32.gmra.mrb[0].mxu0 %v2457
        %v2550 = vpop.f32.mrb[0].mxu0
        %v2551 = vadd.f32 0.0, %v2550
        %v2552 = vpop.f32.mrb[0].mxu0
        %2553 = vmatprep.mubr.f32.mxu0 0.0
        %2554 = vmatmul.mubr.f32.gmra.mrb[0].mxu0 %v2460
        %v2555 = vpop.f32.mrb[0].mxu0
        %v2556 = vadd.f32 0.0, %v2555
        %v2557 = vpop.f32.mrb[0].mxu0
        %2558 = vmatprep.mubr.f32.mxu0 0.0
        %2559 = vmatmul.mubr.f32.gmra.mrb[0].mxu0 %v2463
        %v2560 = vpop.f32.mrb[0].mxu0
        %v2561 = vadd.f32 0.0, %v2560
        %v2562 = vpop.f32.mrb[0].mxu0
        %2563 = vmatprep.mubr.f32.mxu0 0.0
        %2564 = vmatmul.mubr.f32.gmra.mrb[0].mxu0 %v2466
        %v2565 = vpop.f32.mrb[0].mxu0
        %v2566 = vadd.f32 0.0, %v2565
        %v2567 = vpop.f32.mrb[0].mxu0
        %2568 = vmatprep.mubr.f32.mxu0 0.0
        %2569 = vmatmul.mubr.f32.gmra.mrb[0].mxu0 %v2469
        %v2570 = vpop.f32.mrb[0].mxu0
        %v2571 = vadd.f32 0.0, %v2570
        %v2572 = vpop.f32.mrb[0].mxu0
        %2573 = vmatprep.mubr.f32.mxu0 0.0
        %2574 = vmatmul.mubr.f32.gmra.mrb[0].mxu0 %v2472
        %v2575 = vpop.f32.mrb[0].mxu0
        %v2576 = vadd.f32 0.0, %v2575
        %v2577 = vpop.f32.mrb[0].mxu0
        %2578 = vdwg.mxu0
        %v2579 = vmax.f32 %v2182, %v2541
        %v2580 = vmax.f32 %v2183, %v2546
        %v2581 = vmax.f32 %v2184, %v2551
        %v2582 = vmax.f32 %v2185, %v2556
        %v2583 = vmax.f32 %v2186, %v2561
        %v2584 = vmax.f32 %v2187, %v2566
        %v2585 = vmax.f32 %v2188, %v2571
        %v2586 = vmax.f32 %v2189, %v2576
        %2587 = vst.msk [vmem:[%s750] sm:$0xff] %vm1133, %v2579
        %2588 = vst.msk [vmem:[%s750 + $0x8] sm:$0xff] %vm1133, %v2580
        %2589 = vst.msk [vmem:[%s750 + $0x10] sm:$0xff] %vm1133, %v2581
        %2590 = vst.msk [vmem:[%s750 + $0x18] sm:$0xff] %vm1133, %v2582
        %2591 = vst.msk [vmem:[%s750 + $0x20] sm:$0xff] %vm1133, %v2583
        %2592 = vst.msk [vmem:[%s750 + $0x28] sm:$0xff] %vm1133, %v2584
        %2593 = vst.msk [vmem:[%s750 + $0x30] sm:$0xff] %vm1133, %v2585
        %2594 = vst.msk [vmem:[%s750 + $0x38] sm:$0xff] %vm1133, %v2586
        %v2595 = vsel %vm1133, %v2579, 0.0
        %v2596 = vsel %vm1133, %v2580, 0.0
        %v2597 = vadd.f32 %v2595, %v2596
        %v2598 = vsel %vm1133, %v2581, 0.0
        %v2599 = vadd.f32 %v2597, %v2598
        %v2600 = vsel %vm1133, %v2582, 0.0
        %v2601 = vadd.f32 %v2599, %v2600
        %v2602 = vsel %vm1133, %v2583, 0.0
        %v2603 = vadd.f32 %v2601, %v2602
        %v2604 = vsel %vm1133, %v2584, 0.0
        %v2605 = vadd.f32 %v2603, %v2604
        %v2606 = vsel %vm1133, %v2585, 0.0
        %v2607 = vadd.f32 %v2605, %v2606
        %v2608 = vsel %vm1133, %v2586, 0.0
        %v2609 = vadd.f32 %v2607, %v2608
        %v2610 = vrot.slane %v2609, 4
        %v2611 = vadd.f32 %v2609, %v2610
        %v2612 = vrot.slane %v2611, 2
        %v2613 = vadd.f32 %v2611, %v2612
        %v2614 = vrot.slane %v2613, 1
        %v2615 = vadd.f32 %v2613, %v2614
        %vm2616 = vcmask 57344
        %2617 = vst.msk [vmem:[%s727] sm:$0x1] %vm2616, %v2615
        %v2618 = vmul.f32 %v2579, %v2579
        %v2619 = vmul.f32 %v2580, %v2580
        %v2620 = vmul.f32 %v2581, %v2581
        %v2621 = vmul.f32 %v2582, %v2582
        %v2622 = vmul.f32 %v2583, %v2583
        %v2623 = vmul.f32 %v2584, %v2584
        %v2624 = vmul.f32 %v2585, %v2585
        %v2625 = vmul.f32 %v2586, %v2586
        %v2626 = vsel %vm1133, %v2618, 0.0
        %v2627 = vsel %vm1133, %v2619, 0.0
        %v2628 = vadd.f32 %v2626, %v2627
        %v2629 = vsel %vm1133, %v2620, 0.0
        %v2630 = vadd.f32 %v2628, %v2629
        %v2631 = vsel %vm1133, %v2621, 0.0
        %v2632 = vadd.f32 %v2630, %v2631
        %v2633 = vsel %vm1133, %v2622, 0.0
        %v2634 = vadd.f32 %v2632, %v2633
        %v2635 = vsel %vm1133, %v2623, 0.0
        %v2636 = vadd.f32 %v2634, %v2635
        %v2637 = vsel %vm1133, %v2624, 0.0
        %v2638 = vadd.f32 %v2636, %v2637
        %v2639 = vsel %vm1133, %v2625, 0.0
        %v2640 = vadd.f32 %v2638, %v2639
        %v2641 = vrot.slane %v2640, 4
        %v2642 = vadd.f32 %v2640, %v2641
        %v2643 = vrot.slane %v2642, 2
        %v2644 = vadd.f32 %v2642, %v2643
        %v2645 = vrot.slane %v2644, 1
        %v2646 = vadd.f32 %v2644, %v2645
        %2647 = vst.msk [vmem:[%s733] sm:$0x1] %vm2616, %v2646
        %s2648 = smul.u32 8, %s28
        %p2649 = scmp.lt.s32.totalorder %s27, 1
        %s2650 = scalar_select %p2649, %s27, 1
        %p2651 = scmp.lt.s32.totalorder %s2648, 7
        %s2652 = scalar_select %p2651, %s2648, 7
        %s2653 = smul.addr %s2650, 8
        %s2654 = sadd.s32 %s2652, %s2653
        %s2655 = smul.addr %s2654, 8
        %s2656 = scalar_lea.vmem %s3, %s2655
        %s2657 = sand.u32 %s154, 1
        %s2658 = scalar_lea.sflag [#allocation5], %s2657
        %s2659 = sand.u32 %s154, 1
        %s2660 = scalar_lea.vmem [#allocation4], %s2659
        %s2661 = sand.u32 %s182, 1
        %s2662 = scalar_lea.sflag [#allocation7], %s2661
        %s2663 = sand.u32 %s182, 1
        %s2664 = scalar_lea.vmem [#allocation6], %s2663
        // Predicated region
        $region123: #{tpu_custom_call.1} parent=113 // pred_check
          %p2665 = pneg %p136
        $region124: #{tpu_custom_call.1} parent=113 // pred_check_branch
          %2667 = sbr.rel (%p2665) target = $region126
        $region125: #{tpu_custom_call.1} parent=113 // pred_region
          %s2668 = smul.u32 8, %s28
        $region126: #{tpu_custom_call.1} parent=113 // pred_fallthru
          _
        // Predicated region
        $region127: #{tpu_custom_call.1} parent=113 // pred_check
          %p2669 = pneg %p164
        $region128: #{tpu_custom_call.1} parent=113 // pred_check_branch
          %2671 = sbr.rel (%p2669) target = $region130
        $region129: #{tpu_custom_call.1} parent=113 // pred_region
          %s2673 = ssub.s32 16, 16
          %2674 = vsyncadd %s2658, %s2673
          %s2675 = sadd.s32 %s28, %s27
          %s2676 = smul.addr %s2675, 16
          %s2677 = scalar_lea.hbm %s4, %s2676
          %s2679 = sshll.u32 %s2660, 4
          %s2680 = int_to_ptr.vmem [resolvable:$true] %s2679
          %2682 = dma.vmem_to_hbm [thread:$0]  %s2680, 16, %s2677, %s2658
        $region130: #{tpu_custom_call.1} parent=113 // pred_fallthru
          _
        // Predicated region
        $region131: #{tpu_custom_call.1} parent=113 // pred_check
          %p2683 = pneg %p192
        $region132: #{tpu_custom_call.1} parent=113 // pred_check_branch
          %2685 = sbr.rel (%p2683) target = $region134
        $region133: #{tpu_custom_call.1} parent=113 // pred_region
          %s2687 = ssub.s32 16, 16
          %2688 = vsyncadd %s2662, %s2687
          %s2689 = sadd.s32 %s28, %s27
          %s2690 = smul.addr %s2689, 16
          %s2691 = scalar_lea.hbm %s5, %s2690
          %s2693 = sshll.u32 %s2664, 4
          %s2694 = int_to_ptr.vmem [resolvable:$true] %s2693
          %2696 = dma.vmem_to_hbm [thread:$0]  %s2694, 16, %s2691, %s2662
        $region134: #{tpu_custom_call.1} parent=113 // pred_fallthru
          _
      $region114: #{tpu_custom_call.1} parent=5 // pred_fallthru
        _
      %p2697 = scmp.le.s32.totalorder 2, %s18
      // Predicated region
      $region135: #{tpu_custom_call.1} parent=5 // pred_check
        %p2698 = pneg %p2697
      $region136: #{tpu_custom_call.1} parent=5 // pred_check_branch
        %2700 = sbr.rel (%p2698) target = $region138
      $region137: #{tpu_custom_call.1} parent=5 // pred_region
        %s2701 = ssub.s32 %s18, 2
        // Predicated region
        $region139: #{tpu_custom_call.1} parent=137 // pred_check
          %p2702 = pneg %p142
        $region140: #{tpu_custom_call.1} parent=137 // pred_check_branch
          %2704 = sbr.rel (%p2702) target = $region142
        $region141: #{tpu_custom_call.1} parent=137 // pred_region
          %s2705 = smul.u32 8, %s30
          %p2706 = scmp.lt.s32.totalorder %s29, 1
          %s2707 = scalar_select %p2706, %s29, 1
          %p2708 = scmp.lt.s32.totalorder %s2705, 7
          %s2709 = scalar_select %p2708, %s2705, 7
          %s2710 = smul.addr %s2707, 8
          %s2711 = sadd.s32 %s2709, %s2710
          %s2712 = smul.addr %s2711, 8
          %s2713 = scalar_lea.vmem %s3, %s2712
        $region142: #{tpu_custom_call.1} parent=137 // pred_fallthru
          _
        // Predicated region
        $region143: #{tpu_custom_call.1} parent=137 // pred_check
          %p2714 = pneg %p170
        $region144: #{tpu_custom_call.1} parent=137 // pred_check_branch
          %2716 = sbr.rel (%p2714) target = $region146
        $region145: #{tpu_custom_call.1} parent=137 // pred_region
          %s2717 = sand.u32 %s155, 1
          %s2718 = scalar_lea.sflag [#allocation5], %s2717
          %s2719 = sand.u32 %s155, 1
          %s2720 = scalar_lea.vmem [#allocation4], %s2719
          %2721 = dma.done %s2718, 16
        $region146: #{tpu_custom_call.1} parent=137 // pred_fallthru
          _
        // Predicated region
        $region147: #{tpu_custom_call.1} parent=137 // pred_check
          %p2722 = pneg %p198
        $region148: #{tpu_custom_call.1} parent=137 // pred_check_branch
          %2724 = sbr.rel (%p2722) target = $region150
        $region149: #{tpu_custom_call.1} parent=137 // pred_region
          %s2725 = sand.u32 %s183, 1
          %s2726 = scalar_lea.sflag [#allocation7], %s2725
          %s2727 = sand.u32 %s183, 1
          %s2728 = scalar_lea.vmem [#allocation6], %s2727
          %2729 = dma.done %s2726, 16
        $region150: #{tpu_custom_call.1} parent=137 // pred_fallthru
          _
      $region138: #{tpu_custom_call.1} parent=5 // pred_fallthru
        _
    $region6: #{tpu_custom_call.1} parent=1 // loop_footer
      %s22 = sadd.s32 1, %s18
    $region7: #{tpu_custom_call.1} parent=1 // loop_footer_branch
      %17 = sbr.rel target = $region3
    $region8: #{tpu_custom_call.1} parent=1 // loop_exit
      _
    %2730 = vsyncpa [#allocation5], 1
    %s2731 = scalar_lea.sflag [#allocation5], 1
    %2732 = vsyncpa %s2731, 1
    %2733 = vsyncpa [#allocation7], 1
    %s2734 = scalar_lea.sflag [#allocation7], 1
    %2735 = vsyncpa %s2734, 1

</llo_original>
